<compile_context>
chip_gen: v6e
topology: v6e:2x2x1
jax: 0.10.0
libtpu: 0.0.40
codegen_flags: <defaults>
</compile_context>

<pallas_src>
import functools

import numpy as np
import jax
import jax.numpy as jnp
from jax.experimental import pallas as pl
from jax.experimental.pallas import tpu as pltpu

K_INFL = 3          # DeformationGraph.k
MAX_NEIGH = 18      # DeformationGraph.max_neigh_num

# Lane-tile sizes (multiples of 128).  Per-step VMEM use is dominated by the
# (Mp, TILE) one-hot temporaries; for very large node counts M shrink these.
_MAX_TILE_N = 2048
_MAX_TILE_E = 2048
_VMEM_LIMIT = 32 * 1024 * 1024   # raises v5e's 16 MiB default; default on v6e/v7x


def _round_up(x, m):
    return ((x + m - 1) // m) * m


def _rodrigues_rows(r):
    """Axis-angle vectors (3, M) -> row-major 3x3 rotations as rows (9, M)."""
    rp = r + 1e-8
    angle = jnp.sqrt(jnp.sum(rp * rp, axis=0, keepdims=True))       # (1, M)
    u = r / angle
    a, b, c = u[0:1, :], u[1:2, :], u[2:3, :]
    s = jnp.sin(angle)
    omc = 1.0 - jnp.cos(angle)
    return jnp.concatenate([
        1.0 - omc * (b * b + c * c), -s * c + omc * a * b, s * b + omc * a * c,
        s * c + omc * a * b, 1.0 - omc * (a * a + c * c), -s * a + omc * b * c,
        -s * b + omc * a * c, s * a + omc * b * c, 1.0 - omc * (a * a + b * b),
    ], axis=0)                                                       # (9, M)


# --------------------------------------------------------------------------
# Kernel 1: blend-skinning warp, tiled over vertices (lane axis).
#   node tables (whole, VMEM-resident): r (3,Mp), c (3,Mp), t (3,Mp)
#   per-tile:   v (3,T), infl idx (K,T) int32, weights (K,T)
#   out:        warped (3,T)
# --------------------------------------------------------------------------
def warp_kernel(r_ref, c_ref, t_ref, v_ref, idx_ref, w_ref, out_ref):
    Mp = c_ref.shape[1]
    tile = v_ref.shape[1]

    # Per-node tables recomputed each step (O(M) work, negligible; safe with a
    # "parallel" grid axis where a step-0-only init would break on megacore).
    R9 = _rodrigues_rows(r_ref[...])                                 # (9, Mp)
    c = c_ref[...]
    t = t_ref[...]
    # q_m = c_m + t_m - R_m @ c_m  (per-node affine offset)
    q_rows = []
    for i in range(3):
        rc = (R9[3 * i + 0:3 * i + 1, :] * c[0:1, :]
              + R9[3 * i + 1:3 * i + 2, :] * c[1:2, :]
              + R9[3 * i + 2:3 * i + 3, :] * c[2:3, :])
        q_rows.append(c[i:i + 1, :] + t[i:i + 1, :] - rc)
    Rq = jnp.concatenate([R9] + q_rows, axis=0)                      # (12, Mp)

    # Weighted one-hot scatter matrix: W[m, n] = sum_k w[n,k] * [infl[n,k] == m]
    idx = idx_ref[...]                                               # (K, T) i32
    w = w_ref[...]                                                   # (K, T) f32
    m_iota = jax.lax.broadcasted_iota(jnp.int32, (Mp, tile), 0)
    Wsel = jnp.zeros((Mp, tile), jnp.float32)
    for k in range(K_INFL):
        Wsel = Wsel + jnp.where(m_iota == idx[k:k + 1, :], w[k:k + 1, :], 0.0)

    # Gather + blend on the MXU:  [A ; b] = [R9 ; q] @ Wsel  -> (12, T)
    AB = jnp.dot(Rq, Wsel, precision=jax.lax.Precision.HIGHEST,
                 preferred_element_type=jnp.float32)

    v = v_ref[...]                                                   # (3, T)
    for i in range(3):                       # warped_i = A[i,:] . v + b_i
        out_ref[i:i + 1, :] = (AB[3 * i + 0:3 * i + 1, :] * v[0:1, :]
                               + AB[3 * i + 1:3 * i + 2, :] * v[1:2, :]
                               + AB[3 * i + 2:3 * i + 3, :] * v[2:3, :]
                               + AB[9 + i:10 + i, :])


# --------------------------------------------------------------------------
# Kernel 2: ARAP + smooth-rotation losses, tiled over edges (lane axis),
# accumulating into resident (1,1) output blocks (init step 0, finalize last).
# --------------------------------------------------------------------------
def loss_kernel(r_ref, c_ref, t_ref, ii_ref, jj_ref, arap_ref, sr_ref,
                *, inv_num_nodes, inv_sr_count):
    step = pl.program_id(0)

    @pl.when(step == 0)
    def _init():
        arap_ref[...] = jnp.zeros_like(arap_ref)
        sr_ref[...] = jnp.zeros_like(sr_ref)

    Mp = c_ref.shape[1]
    tile = ii_ref.shape[1]

    R9 = _rodrigues_rows(r_ref[...])                                 # (9, Mp)
    c = c_ref[...]
    p = c + t_ref[...]                                               # (3, Mp)
    F = jnp.concatenate([p, c, R9], axis=0)                          # (15, Mp)

    m_iota = jax.lax.broadcasted_iota(jnp.int32, (Mp, tile), 0)
    oh_i = (m_iota == ii_ref[...]).astype(jnp.float32)               # (Mp, T)
    oh_j = (m_iota == jj_ref[...]).astype(jnp.float32)

    # Gather [p, c, R] for both edge endpoints with two MXU matmuls.
    Gi = jnp.dot(F, oh_i, precision=jax.lax.Precision.HIGHEST,
                 preferred_element_type=jnp.float32)                 # (15, T)
    Gj = jnp.dot(F, oh_j, precision=jax.lax.Precision.HIGHEST,
                 preferred_element_type=jnp.float32)

    d = Gi[3:6, :] - Gj[3:6, :]                                      # c_i - c_j
    arap_part = jnp.zeros((1, 1), jnp.float32)
    for i in range(3):
        rv = (Gi[6 + 3 * i + 0:6 + 3 * i + 1, :] * d[0:1, :]
              + Gi[6 + 3 * i + 1:6 + 3 * i + 2, :] * d[1:2, :]
              + Gi[6 + 3 * i + 2:6 + 3 * i + 3, :] * d[2:3, :])
        diff = Gi[i:i + 1, :] - Gj[i:i + 1, :] - rv
        arap_part = arap_part + jnp.sum(diff * diff, keepdims=True)
    dR = Gi[6:15, :] - Gj[6:15, :]
    sr_part = jnp.sum(dR * dR, keepdims=True)

    arap_ref[...] += arap_part
    sr_ref[...] += sr_part

    @pl.when(step == pl.num_programs(0) - 1)
    def _finalize():
        arap_ref[...] = arap_ref[...] * inv_num_nodes
        sr_ref[...] = sr_ref[...] * inv_sr_count


# --------------------------------------------------------------------------
# Wrapper: DeformationGraph.forward
# --------------------------------------------------------------------------
def deformation_graph_forward(vertices, opt_d_rotations, opt_d_translations,
                              nodes_idx, influence_nodes_idx, weights,
                              one_ring_neigh):
    f32 = jnp.float32
    N = vertices.shape[0]
    M = nodes_idx.shape[0]
    E = M * MAX_NEIGH

    Mp = _round_up(M, 8)
    tile_n = min(_MAX_TILE_N, _round_up(N, 128))
    Np = _round_up(N, tile_n)
    tile_e = min(_MAX_TILE_E, _round_up(E, 128))
    Ep = _round_up(E, tile_e)

    # Small per-node tables, component-major, zero-padded to Mp lanes.
    nodes = vertices[nodes_idx].astype(f32)                           # (M, 3)
    cT = jnp.zeros((3, Mp), f32).at[:, :M].set(nodes.T)
    rT = jnp.zeros((3, Mp), f32).at[:, :M].set(opt_d_rotations[0].T.astype(f32))
    tT = jnp.zeros((3, Mp), f32).at[:, :M].set(opt_d_translations[0].T.astype(f32))

    # Per-vertex operands (transpose/cast once, outside the hot loop).
    vT = jnp.zeros((3, Np), f32).at[:, :N].set(vertices.T.astype(f32))
    inflT = jnp.zeros((K_INFL, Np), jnp.int32).at[:, :N].set(
        influence_nodes_idx.T.astype(jnp.int32))
    wT = jnp.zeros((K_INFL, Np), f32).at[:, :N].set(weights.T.astype(f32))

    node_spec = pl.BlockSpec((3, Mp), lambda i: (0, 0))

    warped_T = pl.pallas_call(
        warp_kernel,
        out_shape=jax.ShapeDtypeStruct((3, Np), f32),
        grid=(Np // tile_n,),
        in_specs=[node_spec, node_spec, node_spec,
                  pl.BlockSpec((3, tile_n), lambda i: (0, i)),
                  pl.BlockSpec((K_INFL, tile_n), lambda i: (0, i)),
                  pl.BlockSpec((K_INFL, tile_n), lambda i: (0, i))],
        out_specs=pl.BlockSpec((3, tile_n), lambda i: (0, i)),
        compiler_params=pltpu.CompilerParams(
            dimension_semantics=("parallel",), vmem_limit_bytes=_VMEM_LIMIT),
    )(rT, cT, tT, vT, inflT, wT)
    warped_vertices = warped_T[:, :N].T                               # (N, 3)

    # Per-edge endpoint index tables; padded edges use i == j == 0 so they
    # contribute exactly zero to both losses.
    idx_i = jnp.repeat(jnp.arange(M, dtype=jnp.int32), MAX_NEIGH)     # (E,)
    idx_j = one_ring_neigh.reshape(-1).astype(jnp.int32)              # (E,)
    ii = jnp.zeros((1, Ep), jnp.int32).at[0, :E].set(idx_i)
    jj = jnp.zeros((1, Ep), jnp.int32).at[0, :E].set(idx_j)

    arap, sr = pl.pallas_call(
        functools.partial(loss_kernel,
                          inv_num_nodes=1.0 / float(M),
                          inv_sr_count=1.0 / float(E * 9)),
        out_shape=(jax.ShapeDtypeStruct((1, 1), f32),
                   jax.ShapeDtypeStruct((1, 1), f32)),
        grid=(Ep // tile_e,),
        in_specs=[node_spec, node_spec, node_spec,
                  pl.BlockSpec((1, tile_e), lambda e: (0, e)),
                  pl.BlockSpec((1, tile_e), lambda e: (0, e))],
        out_specs=(pl.BlockSpec((1, 1), lambda e: (0, 0)),
                   pl.BlockSpec((1, 1), lambda e: (0, 0))),
        compiler_params=pltpu.CompilerParams(
            dimension_semantics=("arbitrary",), vmem_limit_bytes=_VMEM_LIMIT),
    )(rT, cT, tT, ii, jj)

    return warped_vertices, arap[0, 0], sr[0, 0]


# --------------------------------------------------------------------------
# Pure-JAX reference (mirrors the PyTorch forward exactly) for validation.
# --------------------------------------------------------------------------
def _reference(vertices, rot, trans, nodes_idx, infl, weights, one_ring):
    N = vertices.shape[0]
    M = nodes_idx.shape[0]
    r = rot[0]
    angle = jnp.linalg.norm(r + 1e-8, axis=1, keepdims=True)
    u = r / angle
    a, b, c = u[:, 0], u[:, 1], u[:, 2]
    zeros = jnp.zeros_like(a)
    K = jnp.stack([zeros, -c, b, c, zeros, -a, -b, a, zeros],
                  axis=1).reshape(M, 3, 3)
    s = jnp.sin(angle)[:, :, None]
    cs = jnp.cos(angle)[:, :, None]
    R = jnp.eye(3)[None] + s * K + (1.0 - cs) * jnp.einsum('bij,bjk->bik', K, K)

    nodes = vertices[nodes_idx]
    flat = infl.reshape(-1)
    cg = nodes[flat]
    Rg = R[flat]
    tg = trans[0][flat]
    v_rep = jnp.repeat(vertices, K_INFL, axis=0)
    warped = ((jnp.einsum('bij,bj->bi', Rg, v_rep - cg) + cg + tg)
              .reshape(N, K_INFL, 3) * weights[..., None]).sum(axis=1)

    onr = one_ring.reshape(-1)
    p = nodes + trans[0]
    pi = jnp.repeat(p, MAX_NEIGH, axis=0)
    pj = p[onr]
    d = jnp.repeat(nodes, MAX_NEIGH, axis=0) - nodes[onr]
    Ri = jnp.repeat(R, MAX_NEIGH, axis=0)
    Rj = R[onr]
    diff = pi - pj - jnp.einsum('bij,bj->bi', Ri, d)
    arap = jnp.sum(diff ** 2) / M
    sr = jnp.mean((Ri - Rj) ** 2)
    return warped, arap, sr


if __name__ == "__main__":
    # Small, consistent shapes: N vertices, M = N // 2 graph nodes.
    N, M = 128, 64
    key = jax.random.PRNGKey(0)
    k1, k2, k3, k4, k5, k6, k7 = jax.random.split(key, 7)

    vertices = jax.random.normal(k1, (N, 3), jnp.float32)
    opt_d_rotations = 0.1 * jax.random.normal(k2, (1, M, 3), jnp.float32)
    opt_d_translations = 0.05 * jax.random.normal(k3, (1, M, 3), jnp.float32)

    # Deterministic synthetic graph buffers (normally built by construct_graph).
    nodes_idx = jax.random.permutation(k4, N)[:M].astype(jnp.int32)
    influence_nodes_idx = jax.random.randint(k5, (N, K_INFL), 0, M,
                                             dtype=jnp.int32)
    w_raw = jax.random.uniform(k6, (N, K_INFL), jnp.float32, 0.1, 1.0)
    weights = w_raw / jnp.sum(w_raw, axis=1, keepdims=True)
    one_ring_neigh = jax.random.randint(k7, (M, MAX_NEIGH), 0, M,
                                        dtype=jnp.int32)

    warped, arap, sr = deformation_graph_forward(
        vertices, opt_d_rotations, opt_d_translations,
        nodes_idx, influence_nodes_idx, weights, one_ring_neigh)
    jax.block_until_ready((warped, arap, sr))

    warped_ref, arap_ref, sr_ref = _reference(
        vertices, opt_d_rotations, opt_d_translations,
        nodes_idx, influence_nodes_idx, weights, one_ring_neigh)

    assert np.allclose(np.asarray(warped), np.asarray(warped_ref),
                       rtol=1e-3, atol=1e-4)
    assert np.allclose(float(arap), float(arap_ref), rtol=1e-3, atol=1e-5)
    assert np.allclose(float(sr), float(sr_ref), rtol=1e-3, atol=1e-6)

    print("KERNEL_OK")
</pallas_src>

<mosaic_0001>
module attributes {stable_mosaic.version = 11 : i64} {
  func.func @warp_kernel(%arg0: i32, %arg1: memref<3x64xf32, #tpu.memory_space<vmem>>, %arg2: memref<3x64xf32, #tpu.memory_space<vmem>>, %arg3: memref<3x64xf32, #tpu.memory_space<vmem>>, %arg4: memref<3x128xf32, #tpu.memory_space<vmem>>, %arg5: memref<3x128xi32, #tpu.memory_space<vmem>>, %arg6: memref<3x128xf32, #tpu.memory_space<vmem>>, %arg7: memref<3x128xf32, #tpu.memory_space<vmem>>) attributes {dimension_semantics = [#tpu.dimension_semantics<parallel>], iteration_bounds = array<i64: 1>, scalar_prefetch = 0 : i64, scratch_operands = 0 : i64, tpu.core_type = #tpu.core_type<tc>, window_params = [{pipeline_mode = #tpu.pipeline_mode<synchronous>, transform_indices = @transform_0, window_bounds = array<i64: 3, 64>}, {pipeline_mode = #tpu.pipeline_mode<synchronous>, transform_indices = @transform_1, window_bounds = array<i64: 3, 64>}, {pipeline_mode = #tpu.pipeline_mode<synchronous>, transform_indices = @transform_2, window_bounds = array<i64: 3, 64>}, {transform_indices = @transform_3, window_bounds = array<i64: 3, 128>}, {transform_indices = @transform_4, window_bounds = array<i64: 3, 128>}, {transform_indices = @transform_5, window_bounds = array<i64: 3, 128>}, {transform_indices = @transform_6, window_bounds = array<i64: 3, 128>}]} {
    %c0 = arith.constant 0 : index
    %c0_0 = arith.constant 0 : index
    %0 = vector.load %arg1[%c0, %c0_0] : memref<3x64xf32, #tpu.memory_space<vmem>>, vector<3x64xf32>
    %cst = arith.constant 9.99999993E-9 : f32
    %1 = vector.broadcast %cst : f32 to vector<3x64xf32>
    %2 = arith.addf %0, %1 : vector<3x64xf32>
    %3 = arith.mulf %2, %2 : vector<3x64xf32>
    %cst_1 = arith.constant dense<0.000000e+00> : vector<64xf32>
    %4 = vector.multi_reduction <add>, %3, %cst_1 [0] : vector<3x64xf32> to vector<64xf32>
    %5 = vector.shape_cast %4 : vector<64xf32> to vector<1x64xf32>
    %6 = math.sqrt %5 : vector<1x64xf32>
    %7 = vector.broadcast %6 : vector<1x64xf32> to vector<3x64xf32>
    %8 = arith.divf %0, %7 : vector<3x64xf32>
    %9 = vector.extract_strided_slice %8 {offsets = [0, 0], sizes = [1, 64], strides = [1, 1]} : vector<3x64xf32> to vector<1x64xf32>
    %10 = vector.extract_strided_slice %8 {offsets = [1, 0], sizes = [1, 64], strides = [1, 1]} : vector<3x64xf32> to vector<1x64xf32>
    %11 = vector.extract_strided_slice %8 {offsets = [2, 0], sizes = [1, 64], strides = [1, 1]} : vector<3x64xf32> to vector<1x64xf32>
    %12 = math.sin %6 : vector<1x64xf32>
    %13 = math.cos %6 : vector<1x64xf32>
    %cst_2 = arith.constant 1.000000e+00 : f32
    %14 = vector.broadcast %cst_2 : f32 to vector<1x64xf32>
    %15 = arith.subf %14, %13 : vector<1x64xf32>
    %16 = arith.mulf %10, %10 : vector<1x64xf32>
    %17 = arith.mulf %11, %11 : vector<1x64xf32>
    %18 = arith.addf %16, %17 : vector<1x64xf32>
    %19 = arith.mulf %15, %18 : vector<1x64xf32>
    %cst_3 = arith.constant 1.000000e+00 : f32
    %20 = vector.broadcast %cst_3 : f32 to vector<1x64xf32>
    %21 = arith.subf %20, %19 : vector<1x64xf32>
    %cst_4 = arith.constant 0.000000e+00 : f32
    %22 = vector.broadcast %cst_4 : f32 to vector<1x64xf32>
    %23 = arith.subf %22, %12 : vector<1x64xf32>
    %24 = arith.mulf %23, %11 : vector<1x64xf32>
    %25 = arith.mulf %15, %9 : vector<1x64xf32>
    %26 = arith.mulf %25, %10 : vector<1x64xf32>
    %27 = arith.addf %24, %26 : vector<1x64xf32>
    %28 = arith.mulf %12, %10 : vector<1x64xf32>
    %29 = arith.mulf %15, %9 : vector<1x64xf32>
    %30 = arith.mulf %29, %11 : vector<1x64xf32>
    %31 = arith.addf %28, %30 : vector<1x64xf32>
    %32 = arith.mulf %12, %11 : vector<1x64xf32>
    %33 = arith.mulf %15, %9 : vector<1x64xf32>
    %34 = arith.mulf %33, %10 : vector<1x64xf32>
    %35 = arith.addf %32, %34 : vector<1x64xf32>
    %36 = arith.mulf %9, %9 : vector<1x64xf32>
    %37 = arith.mulf %11, %11 : vector<1x64xf32>
    %38 = arith.addf %36, %37 : vector<1x64xf32>
    %39 = arith.mulf %15, %38 : vector<1x64xf32>
    %cst_5 = arith.constant 1.000000e+00 : f32
    %40 = vector.broadcast %cst_5 : f32 to vector<1x64xf32>
    %41 = arith.subf %40, %39 : vector<1x64xf32>
    %cst_6 = arith.constant 0.000000e+00 : f32
    %42 = vector.broadcast %cst_6 : f32 to vector<1x64xf32>
    %43 = arith.subf %42, %12 : vector<1x64xf32>
    %44 = arith.mulf %43, %9 : vector<1x64xf32>
    %45 = arith.mulf %15, %10 : vector<1x64xf32>
    %46 = arith.mulf %45, %11 : vector<1x64xf32>
    %47 = arith.addf %44, %46 : vector<1x64xf32>
    %cst_7 = arith.constant 0.000000e+00 : f32
    %48 = vector.broadcast %cst_7 : f32 to vector<1x64xf32>
    %49 = arith.subf %48, %12 : vector<1x64xf32>
    %50 = arith.mulf %49, %10 : vector<1x64xf32>
    %51 = arith.mulf %15, %9 : vector<1x64xf32>
    %52 = arith.mulf %51, %11 : vector<1x64xf32>
    %53 = arith.addf %50, %52 : vector<1x64xf32>
    %54 = arith.mulf %12, %9 : vector<1x64xf32>
    %55 = arith.mulf %15, %10 : vector<1x64xf32>
    %56 = arith.mulf %55, %11 : vector<1x64xf32>
    %57 = arith.addf %54, %56 : vector<1x64xf32>
    %58 = arith.mulf %9, %9 : vector<1x64xf32>
    %59 = arith.mulf %10, %10 : vector<1x64xf32>
    %60 = arith.addf %58, %59 : vector<1x64xf32>
    %61 = arith.mulf %15, %60 : vector<1x64xf32>
    %cst_8 = arith.constant 1.000000e+00 : f32
    %62 = vector.broadcast %cst_8 : f32 to vector<1x64xf32>
    %63 = arith.subf %62, %61 : vector<1x64xf32>
    %64 = tpu.concatenate %21, %27, %31, %35, %41, %47, %53, %57, %63 in 0 : vector<1x64xf32>, vector<1x64xf32>, vector<1x64xf32>, vector<1x64xf32>, vector<1x64xf32>, vector<1x64xf32>, vector<1x64xf32>, vector<1x64xf32>, vector<1x64xf32> -> vector<9x64xf32>
    %c0_9 = arith.constant 0 : index
    %c0_10 = arith.constant 0 : index
    %65 = vector.load %arg2[%c0_9, %c0_10] : memref<3x64xf32, #tpu.memory_space<vmem>>, vector<3x64xf32>
    %c0_11 = arith.constant 0 : index
    %c0_12 = arith.constant 0 : index
    %66 = vector.load %arg3[%c0_11, %c0_12] : memref<3x64xf32, #tpu.memory_space<vmem>>, vector<3x64xf32>
    %67 = vector.extract_strided_slice %64 {offsets = [0, 0], sizes = [1, 64], strides = [1, 1]} : vector<9x64xf32> to vector<1x64xf32>
    %68 = vector.extract_strided_slice %65 {offsets = [0, 0], sizes = [1, 64], strides = [1, 1]} : vector<3x64xf32> to vector<1x64xf32>
    %69 = arith.mulf %67, %68 : vector<1x64xf32>
    %70 = vector.extract_strided_slice %64 {offsets = [1, 0], sizes = [1, 64], strides = [1, 1]} : vector<9x64xf32> to vector<1x64xf32>
    %71 = vector.extract_strided_slice %65 {offsets = [1, 0], sizes = [1, 64], strides = [1, 1]} : vector<3x64xf32> to vector<1x64xf32>
    %72 = arith.mulf %70, %71 : vector<1x64xf32>
    %73 = arith.addf %69, %72 : vector<1x64xf32>
    %74 = vector.extract_strided_slice %64 {offsets = [2, 0], sizes = [1, 64], strides = [1, 1]} : vector<9x64xf32> to vector<1x64xf32>
    %75 = vector.extract_strided_slice %65 {offsets = [2, 0], sizes = [1, 64], strides = [1, 1]} : vector<3x64xf32> to vector<1x64xf32>
    %76 = arith.mulf %74, %75 : vector<1x64xf32>
    %77 = arith.addf %73, %76 : vector<1x64xf32>
    %78 = vector.extract_strided_slice %65 {offsets = [0, 0], sizes = [1, 64], strides = [1, 1]} : vector<3x64xf32> to vector<1x64xf32>
    %79 = vector.extract_strided_slice %66 {offsets = [0, 0], sizes = [1, 64], strides = [1, 1]} : vector<3x64xf32> to vector<1x64xf32>
    %80 = arith.addf %78, %79 : vector<1x64xf32>
    %81 = arith.subf %80, %77 : vector<1x64xf32>
    %82 = vector.extract_strided_slice %64 {offsets = [3, 0], sizes = [1, 64], strides = [1, 1]} : vector<9x64xf32> to vector<1x64xf32>
    %83 = vector.extract_strided_slice %65 {offsets = [0, 0], sizes = [1, 64], strides = [1, 1]} : vector<3x64xf32> to vector<1x64xf32>
    %84 = arith.mulf %82, %83 : vector<1x64xf32>
    %85 = vector.extract_strided_slice %64 {offsets = [4, 0], sizes = [1, 64], strides = [1, 1]} : vector<9x64xf32> to vector<1x64xf32>
    %86 = vector.extract_strided_slice %65 {offsets = [1, 0], sizes = [1, 64], strides = [1, 1]} : vector<3x64xf32> to vector<1x64xf32>
    %87 = arith.mulf %85, %86 : vector<1x64xf32>
    %88 = arith.addf %84, %87 : vector<1x64xf32>
    %89 = vector.extract_strided_slice %64 {offsets = [5, 0], sizes = [1, 64], strides = [1, 1]} : vector<9x64xf32> to vector<1x64xf32>
    %90 = vector.extract_strided_slice %65 {offsets = [2, 0], sizes = [1, 64], strides = [1, 1]} : vector<3x64xf32> to vector<1x64xf32>
    %91 = arith.mulf %89, %90 : vector<1x64xf32>
    %92 = arith.addf %88, %91 : vector<1x64xf32>
    %93 = vector.extract_strided_slice %65 {offsets = [1, 0], sizes = [1, 64], strides = [1, 1]} : vector<3x64xf32> to vector<1x64xf32>
    %94 = vector.extract_strided_slice %66 {offsets = [1, 0], sizes = [1, 64], strides = [1, 1]} : vector<3x64xf32> to vector<1x64xf32>
    %95 = arith.addf %93, %94 : vector<1x64xf32>
    %96 = arith.subf %95, %92 : vector<1x64xf32>
    %97 = vector.extract_strided_slice %64 {offsets = [6, 0], sizes = [1, 64], strides = [1, 1]} : vector<9x64xf32> to vector<1x64xf32>
    %98 = vector.extract_strided_slice %65 {offsets = [0, 0], sizes = [1, 64], strides = [1, 1]} : vector<3x64xf32> to vector<1x64xf32>
    %99 = arith.mulf %97, %98 : vector<1x64xf32>
    %100 = vector.extract_strided_slice %64 {offsets = [7, 0], sizes = [1, 64], strides = [1, 1]} : vector<9x64xf32> to vector<1x64xf32>
    %101 = vector.extract_strided_slice %65 {offsets = [1, 0], sizes = [1, 64], strides = [1, 1]} : vector<3x64xf32> to vector<1x64xf32>
    %102 = arith.mulf %100, %101 : vector<1x64xf32>
    %103 = arith.addf %99, %102 : vector<1x64xf32>
    %104 = vector.extract_strided_slice %64 {offsets = [8, 0], sizes = [1, 64], strides = [1, 1]} : vector<9x64xf32> to vector<1x64xf32>
    %105 = vector.extract_strided_slice %65 {offsets = [2, 0], sizes = [1, 64], strides = [1, 1]} : vector<3x64xf32> to vector<1x64xf32>
    %106 = arith.mulf %104, %105 : vector<1x64xf32>
    %107 = arith.addf %103, %106 : vector<1x64xf32>
    %108 = vector.extract_strided_slice %65 {offsets = [2, 0], sizes = [1, 64], strides = [1, 1]} : vector<3x64xf32> to vector<1x64xf32>
    %109 = vector.extract_strided_slice %66 {offsets = [2, 0], sizes = [1, 64], strides = [1, 1]} : vector<3x64xf32> to vector<1x64xf32>
    %110 = arith.addf %108, %109 : vector<1x64xf32>
    %111 = arith.subf %110, %107 : vector<1x64xf32>
    %112 = tpu.concatenate %64, %81, %96, %111 in 0 : vector<9x64xf32>, vector<1x64xf32>, vector<1x64xf32>, vector<1x64xf32> -> vector<12x64xf32>
    %c0_13 = arith.constant 0 : index
    %c0_14 = arith.constant 0 : index
    %113 = vector.load %arg5[%c0_13, %c0_14] : memref<3x128xi32, #tpu.memory_space<vmem>>, vector<3x128xi32>
    %c0_15 = arith.constant 0 : index
    %c0_16 = arith.constant 0 : index
    %114 = vector.load %arg6[%c0_15, %c0_16] : memref<3x128xf32, #tpu.memory_space<vmem>>, vector<3x128xf32>
    %115 = tpu.iota {dimensions = array<i32: 0>} : vector<64x128xi32>
    %cst_17 = arith.constant 0.000000e+00 : f32
    %116 = vector.broadcast %cst_17 : f32 to vector<64x128xf32>
    %117 = vector.extract_strided_slice %113 {offsets = [0, 0], sizes = [1, 128], strides = [1, 1]} : vector<3x128xi32> to vector<1x128xi32>
    %118 = vector.broadcast %117 : vector<1x128xi32> to vector<64x128xi32>
    %119 = arith.cmpi eq, %115, %118 : vector<64x128xi32>
    %120 = vector.extract_strided_slice %114 {offsets = [0, 0], sizes = [1, 128], strides = [1, 1]} : vector<3x128xf32> to vector<1x128xf32>
    %cst_18 = arith.constant 0.000000e+00 : f32
    %121 = vector.shape_cast %120 : vector<1x128xf32> to vector<1x128xf32>
    %122 = vector.broadcast %121 : vector<1x128xf32> to vector<64x128xf32>
    %123 = vector.broadcast %cst_18 : f32 to vector<64x128xf32>
    %124 = arith.select %119, %122, %123 : vector<64x128xi1>, vector<64x128xf32>
    %125 = arith.addf %116, %124 : vector<64x128xf32>
    %126 = vector.extract_strided_slice %113 {offsets = [1, 0], sizes = [1, 128], strides = [1, 1]} : vector<3x128xi32> to vector<1x128xi32>
    %127 = vector.broadcast %126 : vector<1x128xi32> to vector<64x128xi32>
    %128 = arith.cmpi eq, %115, %127 : vector<64x128xi32>
    %129 = vector.extract_strided_slice %114 {offsets = [1, 0], sizes = [1, 128], strides = [1, 1]} : vector<3x128xf32> to vector<1x128xf32>
    %cst_19 = arith.constant 0.000000e+00 : f32
    %130 = vector.shape_cast %129 : vector<1x128xf32> to vector<1x128xf32>
    %131 = vector.broadcast %130 : vector<1x128xf32> to vector<64x128xf32>
    %132 = vector.broadcast %cst_19 : f32 to vector<64x128xf32>
    %133 = arith.select %128, %131, %132 : vector<64x128xi1>, vector<64x128xf32>
    %134 = arith.addf %125, %133 : vector<64x128xf32>
    %135 = vector.extract_strided_slice %113 {offsets = [2, 0], sizes = [1, 128], strides = [1, 1]} : vector<3x128xi32> to vector<1x128xi32>
    %136 = vector.broadcast %135 : vector<1x128xi32> to vector<64x128xi32>
    %137 = arith.cmpi eq, %115, %136 : vector<64x128xi32>
    %138 = vector.extract_strided_slice %114 {offsets = [2, 0], sizes = [1, 128], strides = [1, 1]} : vector<3x128xf32> to vector<1x128xf32>
    %cst_20 = arith.constant 0.000000e+00 : f32
    %139 = vector.shape_cast %138 : vector<1x128xf32> to vector<1x128xf32>
    %140 = vector.broadcast %139 : vector<1x128xf32> to vector<64x128xf32>
    %141 = vector.broadcast %cst_20 : f32 to vector<64x128xf32>
    %142 = arith.select %137, %140, %141 : vector<64x128xi1>, vector<64x128xf32>
    %143 = arith.addf %134, %142 : vector<64x128xf32>
    %cst_21 = arith.constant dense<0.000000e+00> : vector<12x128xf32>
    %144 = tpu.matmul %112, %143, %cst_21 {dimension_numbers = #tpu.dot_dimension_numbers<[1], [0], [0], [1], [0, 0, 1, 1], [], []>, precision = #tpu.contract_precision<fp32>} : vector<12x64xf32>, vector<64x128xf32>, vector<12x128xf32> -> vector<12x128xf32>
    %c0_22 = arith.constant 0 : index
    %c0_23 = arith.constant 0 : index
    %145 = vector.load %arg4[%c0_22, %c0_23] : memref<3x128xf32, #tpu.memory_space<vmem>>, vector<3x128xf32>
    %146 = vector.extract_strided_slice %144 {offsets = [0, 0], sizes = [1, 128], strides = [1, 1]} : vector<12x128xf32> to vector<1x128xf32>
    %147 = vector.extract_strided_slice %145 {offsets = [0, 0], sizes = [1, 128], strides = [1, 1]} : vector<3x128xf32> to vector<1x128xf32>
    %148 = arith.mulf %146, %147 : vector<1x128xf32>
    %149 = vector.extract_strided_slice %144 {offsets = [1, 0], sizes = [1, 128], strides = [1, 1]} : vector<12x128xf32> to vector<1x128xf32>
    %150 = vector.extract_strided_slice %145 {offsets = [1, 0], sizes = [1, 128], strides = [1, 1]} : vector<3x128xf32> to vector<1x128xf32>
    %151 = arith.mulf %149, %150 : vector<1x128xf32>
    %152 = arith.addf %148, %151 : vector<1x128xf32>
    %153 = vector.extract_strided_slice %144 {offsets = [2, 0], sizes = [1, 128], strides = [1, 1]} : vector<12x128xf32> to vector<1x128xf32>
    %154 = vector.extract_strided_slice %145 {offsets = [2, 0], sizes = [1, 128], strides = [1, 1]} : vector<3x128xf32> to vector<1x128xf32>
    %155 = arith.mulf %153, %154 : vector<1x128xf32>
    %156 = arith.addf %152, %155 : vector<1x128xf32>
    %157 = vector.extract_strided_slice %144 {offsets = [9, 0], sizes = [1, 128], strides = [1, 1]} : vector<12x128xf32> to vector<1x128xf32>
    %158 = arith.addf %156, %157 : vector<1x128xf32>
    %c0_24 = arith.constant 0 : index
    %c0_25 = arith.constant 0 : index
    %159 = vector.load %arg7[%c0_24, %c0_25] : memref<3x128xf32, #tpu.memory_space<vmem>>, vector<1x128xf32>
    tpu.vector_store %arg7[%c0_24, %c0_25], %158 {strides = array<i32>} : memref<3x128xf32, #tpu.memory_space<vmem>>, vector<1x128xf32>,
    %160 = vector.extract_strided_slice %144 {offsets = [3, 0], sizes = [1, 128], strides = [1, 1]} : vector<12x128xf32> to vector<1x128xf32>
    %161 = vector.extract_strided_slice %145 {offsets = [0, 0], sizes = [1, 128], strides = [1, 1]} : vector<3x128xf32> to vector<1x128xf32>
    %162 = arith.mulf %160, %161 : vector<1x128xf32>
    %163 = vector.extract_strided_slice %144 {offsets = [4, 0], sizes = [1, 128], strides = [1, 1]} : vector<12x128xf32> to vector<1x128xf32>
    %164 = vector.extract_strided_slice %145 {offsets = [1, 0], sizes = [1, 128], strides = [1, 1]} : vector<3x128xf32> to vector<1x128xf32>
    %165 = arith.mulf %163, %164 : vector<1x128xf32>
    %166 = arith.addf %162, %165 : vector<1x128xf32>
    %167 = vector.extract_strided_slice %144 {offsets = [5, 0], sizes = [1, 128], strides = [1, 1]} : vector<12x128xf32> to vector<1x128xf32>
    %168 = vector.extract_strided_slice %145 {offsets = [2, 0], sizes = [1, 128], strides = [1, 1]} : vector<3x128xf32> to vector<1x128xf32>
    %169 = arith.mulf %167, %168 : vector<1x128xf32>
    %170 = arith.addf %166, %169 : vector<1x128xf32>
    %171 = vector.extract_strided_slice %144 {offsets = [10, 0], sizes = [1, 128], strides = [1, 1]} : vector<12x128xf32> to vector<1x128xf32>
    %172 = arith.addf %170, %171 : vector<1x128xf32>
    %c1 = arith.constant 1 : index
    %c0_26 = arith.constant 0 : index
    %173 = vector.load %arg7[%c1, %c0_26] : memref<3x128xf32, #tpu.memory_space<vmem>>, vector<1x128xf32>
    tpu.vector_store %arg7[%c1, %c0_26], %172 {strides = array<i32>} : memref<3x128xf32, #tpu.memory_space<vmem>>, vector<1x128xf32>,
    %174 = vector.extract_strided_slice %144 {offsets = [6, 0], sizes = [1, 128], strides = [1, 1]} : vector<12x128xf32> to vector<1x128xf32>
    %175 = vector.extract_strided_slice %145 {offsets = [0, 0], sizes = [1, 128], strides = [1, 1]} : vector<3x128xf32> to vector<1x128xf32>
    %176 = arith.mulf %174, %175 : vector<1x128xf32>
    %177 = vector.extract_strided_slice %144 {offsets = [7, 0], sizes = [1, 128], strides = [1, 1]} : vector<12x128xf32> to vector<1x128xf32>
    %178 = vector.extract_strided_slice %145 {offsets = [1, 0], sizes = [1, 128], strides = [1, 1]} : vector<3x128xf32> to vector<1x128xf32>
    %179 = arith.mulf %177, %178 : vector<1x128xf32>
    %180 = arith.addf %176, %179 : vector<1x128xf32>
    %181 = vector.extract_strided_slice %144 {offsets = [8, 0], sizes = [1, 128], strides = [1, 1]} : vector<12x128xf32> to vector<1x128xf32>
    %182 = vector.extract_strided_slice %145 {offsets = [2, 0], sizes = [1, 128], strides = [1, 1]} : vector<3x128xf32> to vector<1x128xf32>
    %183 = arith.mulf %181, %182 : vector<1x128xf32>
    %184 = arith.addf %180, %183 : vector<1x128xf32>
    %185 = vector.extract_strided_slice %144 {offsets = [11, 0], sizes = [1, 128], strides = [1, 1]} : vector<12x128xf32> to vector<1x128xf32>
    %186 = arith.addf %184, %185 : vector<1x128xf32>
    %c2 = arith.constant 2 : index
    %c0_27 = arith.constant 0 : index
    %187 = vector.load %arg7[%c2, %c0_27] : memref<3x128xf32, #tpu.memory_space<vmem>>, vector<1x128xf32>
    tpu.vector_store %arg7[%c2, %c0_27], %186 {strides = array<i32>} : memref<3x128xf32, #tpu.memory_space<vmem>>, vector<1x128xf32>,
    return
  }
  func.func @transform_0(%arg0: i32) -> (i32, i32) {
    %c0_i32 = arith.constant 0 : i32
    %c0_i32_0 = arith.constant 0 : i32
    %c0_i32_1 = arith.constant 0 : i32
    return %c0_i32, %c0_i32_0 : i32, i32
  }
  func.func @transform_1(%arg0: i32) -> (i32, i32) {
    %c0_i32 = arith.constant 0 : i32
    %c0_i32_0 = arith.constant 0 : i32
    %c0_i32_1 = arith.constant 0 : i32
    return %c0_i32, %c0_i32_0 : i32, i32
  }
  func.func @transform_2(%arg0: i32) -> (i32, i32) {
    %c0_i32 = arith.constant 0 : i32
    %c0_i32_0 = arith.constant 0 : i32
    %c0_i32_1 = arith.constant 0 : i32
    return %c0_i32, %c0_i32_0 : i32, i32
  }
  func.func @transform_3(%arg0: i32) -> (i32, i32) {
    %c0_i32 = arith.constant 0 : i32
    %c0_i32_0 = arith.constant 0 : i32
    return %c0_i32, %arg0 : i32, i32
  }
  func.func @transform_4(%arg0: i32) -> (i32, i32) {
    %c0_i32 = arith.constant 0 : i32
    %c0_i32_0 = arith.constant 0 : i32
    return %c0_i32, %arg0 : i32, i32
  }
  func.func @transform_5(%arg0: i32) -> (i32, i32) {
    %c0_i32 = arith.constant 0 : i32
    %c0_i32_0 = arith.constant 0 : i32
    return %c0_i32, %arg0 : i32, i32
  }
  func.func @transform_6(%arg0: i32) -> (i32, i32) {
    %c0_i32 = arith.constant 0 : i32
    %c0_i32_0 = arith.constant 0 : i32
    return %c0_i32, %arg0 : i32, i32
  }
}

</mosaic_0001>

<llo_original>
// kernel: tpu_custom_call.1
$region0: #{tpu_custom_call.1}
  #allocation0 [shape = 'u32[]', space=smem, size = 0x4, offset = 0x4, fixed_abs, tag = 'smem constant byte address 0x4 - core index']
  #allocation1 [shape = 'u32[144,128]{1,0:T(1,128)}', space=vmem, size = 0x12000, scoped, tag = 'internal scratch']
  %s0 = inlined_call_operand.hbm [shape: f32[3,64], index: 0, kind: input, shape index: {}]
  %s1 = inlined_call_operand.hbm [shape: f32[3,64], index: 1, kind: input, shape index: {}]
  %s2 = inlined_call_operand.hbm [shape: f32[3,64], index: 2, kind: input, shape index: {}]
  %s3 = inlined_call_operand.vmem [shape: f32[3,128], index: 3, kind: input, shape index: {}]
  %s4 = inlined_call_operand.hbm [shape: s32[3,128], index: 4, kind: input, shape index: {}]
  %s5 = inlined_call_operand.vmem [shape: f32[3,128], index: 5, kind: input, shape index: {}]
  %s6 = inlined_call_operand.hbm [shape: f32[3,128], index: 6, kind: output, shape index: {}]
  %s7 = sld [smem:[#allocation0]]
  $region50: #{tpu_custom_call.1} parent=0
    _
  %s9 = ssub.s32 1, %s7
  %s10 = scalar_select 0, %s9, %s7
  $region1: #{tpu_custom_call.1} parent=0
    #allocation2 [shape = 'u8[2048]{0}', space=vmem, size = 0x800, scoped, tag = 'input window, operand 0, single buffered']
    #allocation3 [shape = 's32[1]{0}', space=sflag, size = 0x4, scoped, tag = 'scoped memory for tpu_custom_call.1']
    #allocation4 [shape = 's32[1]{0}', space=sflag, size = 0x4, scoped, tag = 'scoped memory for tpu_custom_call.1']
    #allocation5 [shape = 'u8[2048]{0}', space=vmem, size = 0x800, scoped, tag = 'input window, operand 1, single buffered']
    #allocation6 [shape = 's32[1]{0}', space=sflag, size = 0x4, scoped, tag = 'scoped memory for tpu_custom_call.1']
    #allocation7 [shape = 'u8[2048]{0}', space=vmem, size = 0x800, scoped, tag = 'input window, operand 2, single buffered']
    #allocation8 [shape = 'u8[2048]{0}', space=vmem, size = 0x800, scoped, tag = 'input window, operand 4, single buffered']
    #allocation9 [shape = 's32[1]{0}', space=sflag, size = 0x4, scoped, tag = 'scoped memory for tpu_custom_call.1']
    #allocation10 [shape = 'u8[2048]{0}', space=vmem, size = 0x800, scoped, tag = 'output window, operand 0, single buffered']
    %11 = vsyncpa [#allocation3], 0
    %12 = vsyncpa [#allocation6], 0
    %13 = vsyncpa [#allocation9], 0
    %14 = vsyncpa [#allocation4], 0
    // Predicated region
    $region2: #{tpu_custom_call.1} parent=1 // pred_check
      _
    $region3: #{tpu_custom_call.1} parent=1 // pred_check_branch
      %16 = sbr.rel (0) target = $region5
    $region4: #{tpu_custom_call.1} parent=1 // pred_region
      %s18 = ssub.s32 64, 64
      %19 = vsyncadd [#allocation3], %s18
      %s21 = sshll.u32 [#allocation2], 4
      %s22 = int_to_ptr.vmem [resolvable:$true] %s21
      %24 = dma.hbm_to_vmem [thread:$0]  %s0, 64, %s22, [#allocation3]
    $region5: #{tpu_custom_call.1} parent=1 // pred_fallthru
      _
    // Predicated region
    $region6: #{tpu_custom_call.1} parent=1 // pred_check
      _
    $region7: #{tpu_custom_call.1} parent=1 // pred_check_branch
      %26 = sbr.rel (0) target = $region9
    $region8: #{tpu_custom_call.1} parent=1 // pred_region
      %s28 = ssub.s32 64, 64
      %29 = vsyncadd [#allocation6], %s28
      %s31 = sshll.u32 [#allocation5], 4
      %s32 = int_to_ptr.vmem [resolvable:$true] %s31
      %34 = dma.hbm_to_vmem [thread:$0]  %s1, 64, %s32, [#allocation6]
    $region9: #{tpu_custom_call.1} parent=1 // pred_fallthru
      _
    // Predicated region
    $region10: #{tpu_custom_call.1} parent=1 // pred_check
      _
    $region11: #{tpu_custom_call.1} parent=1 // pred_check_branch
      %36 = sbr.rel (0) target = $region13
    $region12: #{tpu_custom_call.1} parent=1 // pred_region
      %s38 = ssub.s32 64, 64
      %39 = vsyncadd [#allocation6], %s38
      %s41 = sshll.u32 [#allocation7], 4
      %s42 = int_to_ptr.vmem [resolvable:$true] %s41
      %44 = dma.hbm_to_vmem [thread:$0]  %s2, 64, %s42, [#allocation6]
    $region13: #{tpu_custom_call.1} parent=1 // pred_fallthru
      _
    // Predicated region
    $region14: #{tpu_custom_call.1} parent=1 // pred_check
      _
    $region15: #{tpu_custom_call.1} parent=1 // pred_check_branch
      %46 = sbr.rel (0) target = $region17
    $region16: #{tpu_custom_call.1} parent=1 // pred_region
      _
    $region17: #{tpu_custom_call.1} parent=1 // pred_fallthru
      _
    // Predicated region
    $region18: #{tpu_custom_call.1} parent=1 // pred_check
      _
    $region19: #{tpu_custom_call.1} parent=1 // pred_check_branch
      %48 = sbr.rel (0) target = $region21
    $region20: #{tpu_custom_call.1} parent=1 // pred_region
      %s50 = ssub.s32 64, 64
      %51 = vsyncadd [#allocation9], %s50
      %s53 = sshll.u32 [#allocation8], 4
      %s54 = int_to_ptr.vmem [resolvable:$true] %s53
      %56 = dma.hbm_to_vmem [thread:$0]  %s4, 64, %s54, [#allocation9]
    $region21: #{tpu_custom_call.1} parent=1 // pred_fallthru
      _
    // Predicated region
    $region22: #{tpu_custom_call.1} parent=1 // pred_check
      _
    $region23: #{tpu_custom_call.1} parent=1 // pred_check_branch
      %58 = sbr.rel (0) target = $region25
    $region24: #{tpu_custom_call.1} parent=1 // pred_region
      _
    $region25: #{tpu_custom_call.1} parent=1 // pred_fallthru
      _
    // Predicated region
    $region26: #{tpu_custom_call.1} parent=1 // pred_check
      _
    $region27: #{tpu_custom_call.1} parent=1 // pred_check_branch
      %60 = sbr.rel (0) target = $region29
    $region28: #{tpu_custom_call.1} parent=1 // pred_region
      %61 = dma.done [#allocation3], 64
    $region29: #{tpu_custom_call.1} parent=1 // pred_fallthru
      _
    // Predicated region
    $region30: #{tpu_custom_call.1} parent=1 // pred_check
      _
    $region31: #{tpu_custom_call.1} parent=1 // pred_check_branch
      %63 = sbr.rel (0) target = $region33
    $region32: #{tpu_custom_call.1} parent=1 // pred_region
      %64 = dma.done [#allocation6], 64
    $region33: #{tpu_custom_call.1} parent=1 // pred_fallthru
      _
    // Predicated region
    $region34: #{tpu_custom_call.1} parent=1 // pred_check
      _
    $region35: #{tpu_custom_call.1} parent=1 // pred_check_branch
      %66 = sbr.rel (0) target = $region37
    $region36: #{tpu_custom_call.1} parent=1 // pred_region
      %67 = dma.done [#allocation6], 64
    $region37: #{tpu_custom_call.1} parent=1 // pred_fallthru
      _
    // Predicated region
    $region38: #{tpu_custom_call.1} parent=1 // pred_check
      _
    $region39: #{tpu_custom_call.1} parent=1 // pred_check_branch
      %69 = sbr.rel (0) target = $region41
    $region40: #{tpu_custom_call.1} parent=1 // pred_region
      %70 = dma.done [#allocation9], 64
    $region41: #{tpu_custom_call.1} parent=1 // pred_fallthru
      _
    %v71 = vld [vmem:[#allocation2] sm:$0x7]
    %v72 = vadd.f32 %v71, 1e-08
    %v73 = vmul.f32 %v72, %v72
    %vm74 = vcmask 518144
    %v75 = vsel %vm74, %v73, 0.0
    %v76 = vrot.slane %v75, 4
    %v77 = vadd.f32 %v75, %v76
    %v78 = vrot.slane %v77, 2
    %v79 = vadd.f32 %v77, %v78
    %v80 = vrot.slane %v79, 1
    %v81 = vadd.f32 %v79, %v80
    %v82 = vrsqrt.pop %v81
    %v83 = vmul.f32 %v81, %v82
    %vm84 = vcmp.eq.f32.partialorder %v81, inf
    %v85 = vsel %vm84, %v81, %v83
    %vm86 = vcmp.eq.f32.partialorder %v81, 0.0
    %v87 = vand.u32 %v81, 2147483648
    %v88 = vsel %vm86, %v87, %v85
    %v89 = vrcp.pop %v88
    %v90 = vmul.f32 %v71, %v89
    %v91 = vand.u32 2147483647, %v88
    %vm92 = vcmp.le.f32.partialorder %v91, 0.7853982
    %vm93 = vcmp.lt.s32.totalorder %v88, 0
    %v94 = vand.u32 %v88, 2139095040
    %v95 = vshrl.u32 %v94, 23
    %v96 = vsub.s32 %v95, 127
    %v97 = vand.u32 2147483647, %v88
    %v98 = vand.u32 %v97, 8388607
    %v99 = vor.u32 %v98, 8388608
    %v100 = vsub.s32 0, %v99
    %v101 = vadd.s32 %v96, 1
    %vm102 = vcmp.gt.s32.totalorder %v101, 0
    %v103 = vsel %vm102, %v101, 0
    %v104 = vshrl.u32 %v103, 5
    %v105 = vand.u32 %v103, 31
    %v106 = vsub.s32 32, %v105
    %v107 = vshrl.u32 683565275, %v106
    %v108 = vshll.u32 683565275, %v105
    %v109 = vshrl.u32 2475754826, %v106
    %v110 = vor.u32 %v108, %v109
    %v111 = vshll.u32 2475754826, %v105
    %v112 = vshrl.u32 2131351028, %v106
    %v113 = vor.u32 %v111, %v112
    %v114 = vshll.u32 2131351028, %v105
    %v115 = vshrl.u32 2102212464, %v106
    %v116 = vor.u32 %v114, %v115
    %v117 = vshll.u32 2102212464, %v105
    %v118 = vshrl.u32 920167782, %v106
    %v119 = vor.u32 %v117, %v118
    %v120 = vshll.u32 920167782, %v105
    %v121 = vshrl.u32 1326507024, %v106
    %v122 = vor.u32 %v120, %v121
    %vm123 = vcmp.lt.s32.totalorder %v104, 1
    %vm124 = vcmp.lt.s32.totalorder %v104, 2
    %vm125 = vcmp.lt.s32.totalorder %v104, 3
    %vm126 = vcmp.lt.s32.totalorder %v104, 4
    %v127 = vsel %vm123, %v107, %v110
    %v128 = vsel %vm126, %v116, 2102212464
    %v129 = vsel %vm125, %v113, %v128
    %v130 = vsel %vm124, %v127, %v129
    %v131 = vsel %vm123, %v110, %v113
    %v132 = vsel %vm126, %v119, 920167782
    %v133 = vsel %vm125, %v116, %v132
    %v134 = vsel %vm124, %v131, %v133
    %v135 = vsel %vm123, %v113, %v116
    %v136 = vsel %vm126, %v122, 1326507024
    %v137 = vsel %vm125, %v119, %v136
    %v138 = vsel %vm124, %v135, %v137
    %v139 = vshll.u32 %v99, 8
    %v140 = vmul.u32.u64.compose %v139, %v138
    %v141 = vextract.low.u32 %v140
    %v142 = vextract.high.u32 %v140
    %v143 = vmul.u32.u64.compose %v139, %v134
    %v144 = vextract.low.u32 %v143
    %v145 = vextract.high.u32 %v143
    %v146 = vmul.u32 %v139, %v130
    %v147 = vadd.s32 %v142, %v144
    %vm148 = vc.u32 %v142, %v144
    %v149 = vadd.s32 %v145, 1
    %v150 = vsel %vm148, %v149, %v145
    %v151 = vadd.s32 %v146, %v150
    %v152 = vadd.s32 %v151, 536870912
    %v153 = vshrl.u32 %v152, 30
    %v154 = vshll.u32 %v153, 30
    %v155 = vsub.s32 %v151, %v154
    %vm156 = vcmp.lt.s32.totalorder %v155, 0
    %v157 = vsub.s32 0, %v155
    %v158 = vsel %vm156, %v157, %v155
    %v159 = vclz %v158
    %v160 = vsub.s32 %v159, 2
    %vm161 = vcmp.gt.s32.totalorder 0, %v160
    %v162 = vsel %vm161, 0, %v160
    %v163 = vsub.s32 32, %v162
    %v164 = vshll.u32 %v155, %v162
    %v165 = vshrl.u32 %v147, %v163
    %v166 = vor.u32 %v164, %v165
    %v167 = vsub.s32 4294967266, %v162
    %v168 = vadd.s32 %v167, 127
    %v169 = vshll.u32 %v168, 23
    %v170 = vor.u32 4788187, %v169
    %v171 = vand.u32 2147483647, %v170
    %v173 = vcvt.s32.f32 %v166
    %v174 = vmul.f32 %v173, %v171
    %v175 = vxor.u32 %v174, 2147483648
    %v176 = vsel %vm93, %v175, %v174
    %v177 = vsub.s32 4, %v153
    %v178 = vsel %vm93, %v177, %v153
    %v179 = vsel %vm92, %v88, %v176
    %v180 = vsel %vm92, 0, %v178
    %v181 = vcosq.f32.pop %v179
    %v182 = vsinq.f32.pop %v179
    %vm183 = vweird.f32 %v88
    %v184 = vadd.s32 %v180, 3
    %v185 = vand.u32 %v184, 3
    %vm186 = vcmp.lt.s32.totalorder %v185, 2
    %vm187 = vcmp.eq.s32.totalorder %v185, 0
    %v188 = vxor.u32 %v182, 2147483648
    %v189 = vsel %vm187, %v181, %v188
    %vm190 = vcmp.eq.s32.totalorder %v185, 2
    %v191 = vxor.u32 %v181, 2147483648
    %v192 = vsel %vm190, %v191, %v182
    %v193 = vsel %vm186, %v189, %v192
    %v194 = vsel %vm183, nan, %v193
    %v195 = vand.u32 2147483647, %v88
    %vm196 = vcmp.le.f32.partialorder %v195, 0.7853982
    %vm197 = vcmp.lt.s32.totalorder %v88, 0
    %v198 = vand.u32 %v88, 2139095040
    %v199 = vshrl.u32 %v198, 23
    %v200 = vsub.s32 %v199, 127
    %v201 = vand.u32 2147483647, %v88
    %v202 = vand.u32 %v201, 8388607
    %v203 = vor.u32 %v202, 8388608
    %v204 = vsub.s32 0, %v203
    %v205 = vadd.s32 %v200, 1
    %vm206 = vcmp.gt.s32.totalorder %v205, 0
    %v207 = vsel %vm206, %v205, 0
    %v208 = vshrl.u32 %v207, 5
    %v209 = vand.u32 %v207, 31
    %v210 = vsub.s32 32, %v209
    %v211 = vshrl.u32 683565275, %v210
    %v212 = vshll.u32 683565275, %v209
    %v213 = vshrl.u32 2475754826, %v210
    %v214 = vor.u32 %v212, %v213
    %v215 = vshll.u32 2475754826, %v209
    %v216 = vshrl.u32 2131351028, %v210
    %v217 = vor.u32 %v215, %v216
    %v218 = vshll.u32 2131351028, %v209
    %v219 = vshrl.u32 2102212464, %v210
    %v220 = vor.u32 %v218, %v219
    %v221 = vshll.u32 2102212464, %v209
    %v222 = vshrl.u32 920167782, %v210
    %v223 = vor.u32 %v221, %v222
    %v224 = vshll.u32 920167782, %v209
    %v225 = vshrl.u32 1326507024, %v210
    %v226 = vor.u32 %v224, %v225
    %vm227 = vcmp.lt.s32.totalorder %v208, 1
    %vm228 = vcmp.lt.s32.totalorder %v208, 2
    %vm229 = vcmp.lt.s32.totalorder %v208, 3
    %vm230 = vcmp.lt.s32.totalorder %v208, 4
    %v231 = vsel %vm227, %v211, %v214
    %v232 = vsel %vm230, %v220, 2102212464
    %v233 = vsel %vm229, %v217, %v232
    %v234 = vsel %vm228, %v231, %v233
    %v235 = vsel %vm227, %v214, %v217
    %v236 = vsel %vm230, %v223, 920167782
    %v237 = vsel %vm229, %v220, %v236
    %v238 = vsel %vm228, %v235, %v237
    %v239 = vsel %vm227, %v217, %v220
    %v240 = vsel %vm230, %v226, 1326507024
    %v241 = vsel %vm229, %v223, %v240
    %v242 = vsel %vm228, %v239, %v241
    %v243 = vshll.u32 %v203, 8
    %v244 = vmul.u32.u64.compose %v243, %v242
    %v245 = vextract.low.u32 %v244
    %v246 = vextract.high.u32 %v244
    %v247 = vmul.u32.u64.compose %v243, %v238
    %v248 = vextract.low.u32 %v247
    %v249 = vextract.high.u32 %v247
    %v250 = vmul.u32 %v243, %v234
    %v251 = vadd.s32 %v246, %v248
    %vm252 = vc.u32 %v246, %v248
    %v253 = vadd.s32 %v249, 1
    %v254 = vsel %vm252, %v253, %v249
    %v255 = vadd.s32 %v250, %v254
    %v256 = vadd.s32 %v255, 536870912
    %v257 = vshrl.u32 %v256, 30
    %v258 = vshll.u32 %v257, 30
    %v259 = vsub.s32 %v255, %v258
    %vm260 = vcmp.lt.s32.totalorder %v259, 0
    %v261 = vsub.s32 0, %v259
    %v262 = vsel %vm260, %v261, %v259
    %v263 = vclz %v262
    %v264 = vsub.s32 %v263, 2
    %vm265 = vcmp.gt.s32.totalorder 0, %v264
    %v266 = vsel %vm265, 0, %v264
    %v267 = vsub.s32 32, %v266
    %v268 = vshll.u32 %v259, %v266
    %v269 = vshrl.u32 %v251, %v267
    %v270 = vor.u32 %v268, %v269
    %v271 = vsub.s32 4294967266, %v266
    %v272 = vadd.s32 %v271, 127
    %v273 = vshll.u32 %v272, 23
    %v274 = vor.u32 4788187, %v273
    %v275 = vand.u32 2147483647, %v274
    %v277 = vcvt.s32.f32 %v270
    %v278 = vmul.f32 %v277, %v275
    %v279 = vxor.u32 %v278, 2147483648
    %v280 = vsel %vm197, %v279, %v278
    %v281 = vsub.s32 4, %v257
    %v282 = vsel %vm197, %v281, %v257
    %v283 = vsel %vm196, %v88, %v280
    %v284 = vsel %vm196, 0, %v282
    %v285 = vcosq.f32.pop %v283
    %v286 = vsinq.f32.pop %v283
    %vm287 = vweird.f32 %v88
    %v288 = vand.u32 %v284, 3
    %vm289 = vcmp.lt.s32.totalorder %v288, 2
    %vm290 = vcmp.eq.s32.totalorder %v288, 0
    %v291 = vxor.u32 %v286, 2147483648
    %v292 = vsel %vm290, %v285, %v291
    %vm293 = vcmp.eq.s32.totalorder %v288, 2
    %v294 = vxor.u32 %v285, 2147483648
    %v295 = vsel %vm293, %v294, %v286
    %v296 = vsel %vm289, %v292, %v295
    %v297 = vsel %vm287, nan, %v296
    %v298 = vsub.f32 1.0, %v297
    %v299 = vmul.f32 %v90, %v90
    %v301 = vrot.slane %v299, 1
    %v303 = vadd.f32 %v299, %v301
    %v304 = vmul.f32 %v298, %v303
    %v305 = vsub.f32 1.0, %v304
    %v306 = vsub.f32 0.0, %v194
    %v307 = vmul.f32 %v306, %v90
    %v308 = vmul.f32 %v298, %v90
    %v310 = vrot.slane %v90, 1
    %v312 = vmul.f32 %v308, %v310
    %v314 = vrot.slane %v312, 6
    %v316 = vadd.f32 %v307, %v314
    %v317 = vmul.f32 %v194, %v90
    %v318 = vrot.slane %v90, 2
    %v320 = vmul.f32 %v308, %v318
    %v322 = vrot.slane %v320, 7
    %v324 = vadd.f32 %v317, %v322
    %v325 = vadd.f32 %v317, %v314
    %v326 = vrot.slane %v299, 2
    %v328 = vadd.f32 %v299, %v326
    %v329 = vmul.f32 %v298, %v328
    %v330 = vsub.f32 1.0, %v329
    %v331 = vrot.slane %v312, 1
    %v333 = vadd.f32 %v307, %v331
    %v334 = vadd.f32 %v307, %v322
    %v335 = vadd.f32 %v317, %v331
    %v337 = vrot.slane %v305, 1
    %v340 = vrot.slane %v316, 1
    %v343 = vrot.slane %v324, 7
    %v346 = vrot.slane %v325, 7
    %v349 = vrot.slane %v330, 4
    %v352 = vrot.slane %v333, 3
    %v355 = vrot.slane %v334, 3
    %v358 = vrot.slane %v335, 1
    %vm360 = vcmask 1040384
    %v361 = vsel %vm360, %v337, %v340
    %vm362 = vcmask 1041408
    %v363 = vsel %vm362, %v361, %v343
    %vm364 = vcmask 1042432
    %v365 = vsel %vm364, %v363, %v346
    %vm366 = vcmask 1043456
    %v367 = vsel %vm366, %v365, %v349
    %vm368 = vcmask 1044480
    %v369 = vsel %vm368, %v367, %v352
    %vm370 = vcmask 1045504
    %v371 = vsel %vm370, %v369, %v355
    %vm372 = vcmask 1046528
    %v373 = vsel %vm372, %v371, %v358
    %v374 = vld [vmem:[#allocation5] sm:$0x7]
    %v375 = vld [vmem:[#allocation7] sm:$0x7]
    %v376 = vmul.f32 %v373, %v374
    %v378 = vrot.slane %v376, 1
    %v380 = vadd.f32 %v376, %v378
    %v381 = vrot.slane %v376, 2
    %v383 = vadd.f32 %v380, %v381
    %v384 = vadd.f32 %v374, %v375
    %v385 = vsub.f32 %v384, %v383
    %v387 = vrot.slane %v374, 5
    %v389 = vmul.f32 %v373, %v387
    %v391 = vrot.slane %v389, 1
    %v393 = vadd.f32 %v389, %v391
    %v394 = vrot.slane %v389, 2
    %v396 = vadd.f32 %v393, %v394
    %v398 = vrot.slane %v396, 2
    %v400 = vsub.f32 %v384, %v398
    %v401 = vrot.slane %v374, 2
    %v403 = vmul.f32 %v373, %v401
    %v405 = vrot.slane %v403, 1
    %v407 = vadd.f32 %v403, %v405
    %v408 = vmul.f32 %v305, %v401
    %v410 = vrot.slane %v408, 2
    %v412 = vadd.f32 %v407, %v410
    %v414 = vrot.slane %v412, 4
    %v416 = vsub.f32 %v384, %v414
    %v418 = vrot.slane %v385, 7
    %v421 = vrot.slane %v400, 7
    %v424 = vrot.slane %v416, 7
    %v426 = vsel %vm360, %v305, %v418
    %v427 = vsel %vm362, %v426, %v421
    %v428 = vsel %vm364, %v427, %v424
    %v429 = vld [vmem:[#allocation8] sm:$0x7]
    %v430 = vld [vmem:[%s5] sm:$0x7]
    %v431 = vlaneseq
    %v432 = vshrl.u32 %v431, 7
    %v433 = vadd.s32 %v432, 8
    %v434 = vadd.s32 %v432, 16
    %v435 = vadd.s32 %v432, 24
    %v436 = vadd.s32 %v432, 32
    %v437 = vadd.s32 %v432, 40
    %v438 = vadd.s32 %v432, 48
    %v439 = vadd.s32 %v432, 56
    %v440 = vlaneseq
    %v441 = vshrl.u32 %v440, 7
    %v442 = vsub.s32 0, %v441
    %v443 = vrot.slane %v429, %v442
    %vm444 = vcmp.eq.s32.totalorder %v432, %v443
    %vm445 = vcmp.eq.s32.totalorder %v433, %v443
    %vm446 = vcmp.eq.s32.totalorder %v434, %v443
    %vm447 = vcmp.eq.s32.totalorder %v435, %v443
    %vm448 = vcmp.eq.s32.totalorder %v436, %v443
    %vm449 = vcmp.eq.s32.totalorder %v437, %v443
    %vm450 = vcmp.eq.s32.totalorder %v438, %v443
    %vm451 = vcmp.eq.s32.totalorder %v439, %v443
    %v452 = vlaneseq
    %v453 = vshrl.u32 %v452, 7
    %v454 = vsub.s32 0, %v453
    %v455 = vrot.slane %v430, %v454
    %v456 = vsel %vm444, %v455, 0.0
    %v457 = vsel %vm445, %v455, 0.0
    %v458 = vsel %vm446, %v455, 0.0
    %v459 = vsel %vm447, %v455, 0.0
    %v460 = vsel %vm448, %v455, 0.0
    %v461 = vsel %vm449, %v455, 0.0
    %v462 = vsel %vm450, %v455, 0.0
    %v463 = vsel %vm451, %v455, 0.0
    %v464 = vadd.f32 %v456, 0.0
    %v465 = vadd.f32 %v457, 0.0
    %v466 = vadd.f32 %v458, 0.0
    %v467 = vadd.f32 %v459, 0.0
    %v468 = vadd.f32 %v460, 0.0
    %v469 = vadd.f32 %v461, 0.0
    %v470 = vadd.f32 %v462, 0.0
    %v471 = vadd.f32 %v463, 0.0
    %v472 = vlaneseq
    %v473 = vshrl.u32 %v472, 7
    %v474 = vsub.s32 1, %v473
    %v475 = vrot.slane %v429, %v474
    %vm476 = vcmp.eq.s32.totalorder %v432, %v475
    %vm477 = vcmp.eq.s32.totalorder %v433, %v475
    %vm478 = vcmp.eq.s32.totalorder %v434, %v475
    %vm479 = vcmp.eq.s32.totalorder %v435, %v475
    %vm480 = vcmp.eq.s32.totalorder %v436, %v475
    %vm481 = vcmp.eq.s32.totalorder %v437, %v475
    %vm482 = vcmp.eq.s32.totalorder %v438, %v475
    %vm483 = vcmp.eq.s32.totalorder %v439, %v475
    %v484 = vlaneseq
    %v485 = vshrl.u32 %v484, 7
    %v486 = vsub.s32 1, %v485
    %v487 = vrot.slane %v430, %v486
    %v488 = vsel %vm476, %v487, 0.0
    %v489 = vsel %vm477, %v487, 0.0
    %v490 = vsel %vm478, %v487, 0.0
    %v491 = vsel %vm479, %v487, 0.0
    %v492 = vsel %vm480, %v487, 0.0
    %v493 = vsel %vm481, %v487, 0.0
    %v494 = vsel %vm482, %v487, 0.0
    %v495 = vsel %vm483, %v487, 0.0
    %v496 = vadd.f32 %v464, %v488
    %v497 = vadd.f32 %v465, %v489
    %v498 = vadd.f32 %v466, %v490
    %v499 = vadd.f32 %v467, %v491
    %v500 = vadd.f32 %v468, %v492
    %v501 = vadd.f32 %v469, %v493
    %v502 = vadd.f32 %v470, %v494
    %v503 = vadd.f32 %v471, %v495
    %v504 = vlaneseq
    %v505 = vshrl.u32 %v504, 7
    %v506 = vsub.s32 2, %v505
    %v507 = vrot.slane %v429, %v506
    %vm508 = vcmp.eq.s32.totalorder %v432, %v507
    %vm509 = vcmp.eq.s32.totalorder %v433, %v507
    %vm510 = vcmp.eq.s32.totalorder %v434, %v507
    %vm511 = vcmp.eq.s32.totalorder %v435, %v507
    %vm512 = vcmp.eq.s32.totalorder %v436, %v507
    %vm513 = vcmp.eq.s32.totalorder %v437, %v507
    %vm514 = vcmp.eq.s32.totalorder %v438, %v507
    %vm515 = vcmp.eq.s32.totalorder %v439, %v507
    %v516 = vlaneseq
    %v517 = vshrl.u32 %v516, 7
    %v518 = vsub.s32 2, %v517
    %v519 = vrot.slane %v430, %v518
    %v520 = vsel %vm508, %v519, 0.0
    %v521 = vsel %vm509, %v519, 0.0
    %v522 = vsel %vm510, %v519, 0.0
    %v523 = vsel %vm511, %v519, 0.0
    %v524 = vsel %vm512, %v519, 0.0
    %v525 = vsel %vm513, %v519, 0.0
    %v526 = vsel %vm514, %v519, 0.0
    %v527 = vsel %vm515, %v519, 0.0
    %v528 = vadd.f32 %v496, %v520
    %v529 = vadd.f32 %v497, %v521
    %v530 = vadd.f32 %v498, %v522
    %v531 = vadd.f32 %v499, %v523
    %v532 = vadd.f32 %v500, %v524
    %v533 = vadd.f32 %v501, %v525
    %v534 = vadd.f32 %v502, %v526
    %v535 = vadd.f32 %v503, %v527
    %vm536 = vcmask 523264
    %v538 = vsel %vm536, %v373, 0
    %v541 = vsel %vm536, %v428, 0
    %543 = vmatprep.subr.mxu0 0.0
    %544 = vmatpush1.msra.mxu0 0.0
    %545 = vmatprep.subr.mxu0 0.0
    %546 = vmatpush1.msra.mxu0 0.0
    %547 = vmatprep.subr.mxu0 0.0
    %548 = vmatpush1.msra.mxu0 0.0
    %549 = vmatprep.subr.mxu0 0.0
    %550 = vmatpush1.msra.mxu0 0.0
    %551 = vmatprep.subr.mxu0 0.0
    %552 = vmatpush1.msra.mxu0 0.0
    %553 = vmatprep.subr.mxu0 0.0
    %554 = vmatpush1.msra.mxu0 0.0
    %555 = vmatprep.subr.mxu0 0.0
    %556 = vmatpush1.msra.mxu0 0.0
    %557 = vmatprep.subr.mxu0 0.0
    %558 = vmatpush1.msra.mxu0 0.0
    %559 = vmatprep.subr.mxu0 0.0
    %v560 = vand.u32 %v535, 4294901760
    %561 = vmatpush1.msra.mxu0 %v560
    %562 = vmatprep.subr.mxu0 0.0
    %v563 = vand.u32 %v534, 4294901760
    %564 = vmatpush1.msra.mxu0 %v563
    %565 = vmatprep.subr.mxu0 0.0
    %v566 = vand.u32 %v533, 4294901760
    %567 = vmatpush1.msra.mxu0 %v566
    %568 = vmatprep.subr.mxu0 0.0
    %v569 = vand.u32 %v532, 4294901760
    %570 = vmatpush1.msra.mxu0 %v569
    %571 = vmatprep.subr.mxu0 0.0
    %v572 = vand.u32 %v531, 4294901760
    %573 = vmatpush1.msra.mxu0 %v572
    %574 = vmatprep.subr.mxu0 0.0
    %v575 = vand.u32 %v530, 4294901760
    %576 = vmatpush1.msra.mxu0 %v575
    %577 = vmatprep.subr.mxu0 0.0
    %v578 = vand.u32 %v529, 4294901760
    %579 = vmatpush1.msra.mxu0 %v578
    %580 = vmatprep.subr.mxu0 0.0
    %v581 = vand.u32 %v528, 4294901760
    %582 = vmatpush1.msra.mxu0 %v581
    %583 = vmatprep.subr.mxu0 0.0
    %584 = vmatpush2.msra.mxu0 0.0
    %585 = vmatprep.subr.mxu0 0.0
    %586 = vmatpush2.msra.mxu0 0.0
    %587 = vmatprep.subr.mxu0 0.0
    %588 = vmatpush2.msra.mxu0 0.0
    %589 = vmatprep.subr.mxu0 0.0
    %590 = vmatpush2.msra.mxu0 0.0
    %591 = vmatprep.subr.mxu0 0.0
    %592 = vmatpush2.msra.mxu0 0.0
    %593 = vmatprep.subr.mxu0 0.0
    %594 = vmatpush2.msra.mxu0 0.0
    %595 = vmatprep.subr.mxu0 0.0
    %596 = vmatpush2.msra.mxu0 0.0
    %597 = vmatprep.subr.mxu0 0.0
    %598 = vmatpush2.msra.mxu0 0.0
    %599 = vmatprep.subr.mxu0 0.0
    %600 = vmatpush2.msra.mxu0 0.0
    %601 = vmatprep.subr.mxu0 0.0
    %602 = vmatpush2.msra.mxu0 0.0
    %603 = vmatprep.subr.mxu0 0.0
    %604 = vmatpush2.msra.mxu0 0.0
    %605 = vmatprep.subr.mxu0 0.0
    %606 = vmatpush2.msra.mxu0 0.0
    %607 = vmatprep.subr.mxu0 0.0
    %608 = vmatpush2.msra.mxu0 0.0
    %609 = vmatprep.subr.mxu0 0.0
    %610 = vmatpush2.msra.mxu0 0.0
    %611 = vmatprep.subr.mxu0 0.0
    %612 = vmatpush2.msra.mxu0 0.0
    %613 = vmatprep.subr.mxu0 0.0
    %614 = vmatpush2.msra.mxu0 0.0
    %615 = vmatprep.mubr.f32.mxu0 0.0
    %v616 = vand.u32 %v538, 4294901760
    %v617 = vsub.f32 %v538, %v616
    %v618 = vand.u32 %v617, 4294901760
    %v619 = vsub.f32 %v617, %v618
    %v620 = vand.u32 %v619, 4294901760
    %621 = vmatmul.mubr.f32.gmra.mxu0 %v620
    %v622 = vpop.f32.mrf.mxu0
    %v623 = vadd.f32 0.0, %v622
    %v624 = vpop.f32.mrf.mxu0
    %625 = vmatprep.mubr.f32.mxu0 0.0
    %v626 = vand.u32 %v541, 4294901760
    %v627 = vsub.f32 %v541, %v626
    %v628 = vand.u32 %v627, 4294901760
    %v629 = vsub.f32 %v627, %v628
    %v630 = vand.u32 %v629, 4294901760
    %631 = vmatmul.mubr.f32.gmra.mxu0 %v630
    %v632 = vpop.f32.mrf.mxu0
    %v633 = vadd.f32 0.0, %v632
    %v634 = vpop.f32.mrf.mxu0
    %635 = vdwg.mxu0
    %636 = vmatprep.subr.mxu0 0.0
    %637 = vmatpush1.msra.mxu0 0.0
    %638 = vmatprep.subr.mxu0 0.0
    %639 = vmatpush1.msra.mxu0 0.0
    %640 = vmatprep.subr.mxu0 0.0
    %641 = vmatpush1.msra.mxu0 0.0
    %642 = vmatprep.subr.mxu0 0.0
    %643 = vmatpush1.msra.mxu0 0.0
    %644 = vmatprep.subr.mxu0 0.0
    %645 = vmatpush1.msra.mxu0 0.0
    %646 = vmatprep.subr.mxu0 0.0
    %647 = vmatpush1.msra.mxu0 0.0
    %648 = vmatprep.subr.mxu0 0.0
    %649 = vmatpush1.msra.mxu0 0.0
    %650 = vmatprep.subr.mxu0 0.0
    %651 = vmatpush1.msra.mxu0 0.0
    %652 = vmatprep.subr.mxu0 0.0
    %v653 = vand.u32 %v535, 4294901760
    %v654 = vsub.f32 %v535, %v653
    %v655 = vand.u32 %v654, 4294901760
    %v656 = vsub.f32 %v654, %v655
    %v657 = vand.u32 %v656, 4294901760
    %658 = vmatpush1.msra.mxu0 %v657
    %659 = vmatprep.subr.mxu0 0.0
    %v660 = vand.u32 %v534, 4294901760
    %v661 = vsub.f32 %v534, %v660
    %v662 = vand.u32 %v661, 4294901760
    %v663 = vsub.f32 %v661, %v662
    %v664 = vand.u32 %v663, 4294901760
    %665 = vmatpush1.msra.mxu0 %v664
    %666 = vmatprep.subr.mxu0 0.0
    %v667 = vand.u32 %v533, 4294901760
    %v668 = vsub.f32 %v533, %v667
    %v669 = vand.u32 %v668, 4294901760
    %v670 = vsub.f32 %v668, %v669
    %v671 = vand.u32 %v670, 4294901760
    %672 = vmatpush1.msra.mxu0 %v671
    %673 = vmatprep.subr.mxu0 0.0
    %v674 = vand.u32 %v532, 4294901760
    %v675 = vsub.f32 %v532, %v674
    %v676 = vand.u32 %v675, 4294901760
    %v677 = vsub.f32 %v675, %v676
    %v678 = vand.u32 %v677, 4294901760
    %679 = vmatpush1.msra.mxu0 %v678
    %680 = vmatprep.subr.mxu0 0.0
    %v681 = vand.u32 %v531, 4294901760
    %v682 = vsub.f32 %v531, %v681
    %v683 = vand.u32 %v682, 4294901760
    %v684 = vsub.f32 %v682, %v683
    %v685 = vand.u32 %v684, 4294901760
    %686 = vmatpush1.msra.mxu0 %v685
    %687 = vmatprep.subr.mxu0 0.0
    %v688 = vand.u32 %v530, 4294901760
    %v689 = vsub.f32 %v530, %v688
    %v690 = vand.u32 %v689, 4294901760
    %v691 = vsub.f32 %v689, %v690
    %v692 = vand.u32 %v691, 4294901760
    %693 = vmatpush1.msra.mxu0 %v692
    %694 = vmatprep.subr.mxu0 0.0
    %v695 = vand.u32 %v529, 4294901760
    %v696 = vsub.f32 %v529, %v695
    %v697 = vand.u32 %v696, 4294901760
    %v698 = vsub.f32 %v696, %v697
    %v699 = vand.u32 %v698, 4294901760
    %700 = vmatpush1.msra.mxu0 %v699
    %701 = vmatprep.subr.mxu0 0.0
    %v702 = vand.u32 %v528, 4294901760
    %v703 = vsub.f32 %v528, %v702
    %v704 = vand.u32 %v703, 4294901760
    %v705 = vsub.f32 %v703, %v704
    %v706 = vand.u32 %v705, 4294901760
    %707 = vmatpush1.msra.mxu0 %v706
    %708 = vmatprep.subr.mxu0 0.0
    %709 = vmatpush2.msra.mxu0 0.0
    %710 = vmatprep.subr.mxu0 0.0
    %711 = vmatpush2.msra.mxu0 0.0
    %712 = vmatprep.subr.mxu0 0.0
    %713 = vmatpush2.msra.mxu0 0.0
    %714 = vmatprep.subr.mxu0 0.0
    %715 = vmatpush2.msra.mxu0 0.0
    %716 = vmatprep.subr.mxu0 0.0
    %717 = vmatpush2.msra.mxu0 0.0
    %718 = vmatprep.subr.mxu0 0.0
    %719 = vmatpush2.msra.mxu0 0.0
    %720 = vmatprep.subr.mxu0 0.0
    %721 = vmatpush2.msra.mxu0 0.0
    %722 = vmatprep.subr.mxu0 0.0
    %723 = vmatpush2.msra.mxu0 0.0
    %724 = vmatprep.subr.mxu0 0.0
    %725 = vmatpush2.msra.mxu0 0.0
    %726 = vmatprep.subr.mxu0 0.0
    %727 = vmatpush2.msra.mxu0 0.0
    %728 = vmatprep.subr.mxu0 0.0
    %729 = vmatpush2.msra.mxu0 0.0
    %730 = vmatprep.subr.mxu0 0.0
    %731 = vmatpush2.msra.mxu0 0.0
    %732 = vmatprep.subr.mxu0 0.0
    %733 = vmatpush2.msra.mxu0 0.0
    %734 = vmatprep.subr.mxu0 0.0
    %735 = vmatpush2.msra.mxu0 0.0
    %736 = vmatprep.subr.mxu0 0.0
    %737 = vmatpush2.msra.mxu0 0.0
    %738 = vmatprep.subr.mxu0 0.0
    %739 = vmatpush2.msra.mxu0 0.0
    %740 = vmatprep.mubr.f32.mxu0 0.0
    %v741 = vand.u32 %v538, 4294901760
    %742 = vmatmul.mubr.f32.gmra.mxu0 %v741
    %v743 = vpop.f32.mrf.mxu0
    %v744 = vadd.f32 %v623, %v743
    %v745 = vpop.f32.mrf.mxu0
    %746 = vmatprep.mubr.f32.mxu0 0.0
    %v747 = vand.u32 %v541, 4294901760
    %748 = vmatmul.mubr.f32.gmra.mxu0 %v747
    %v749 = vpop.f32.mrf.mxu0
    %v750 = vadd.f32 %v633, %v749
    %v751 = vpop.f32.mrf.mxu0
    %752 = vdwg.mxu0
    %753 = vmatprep.subr.mxu0 0.0
    %754 = vmatpush1.msra.mxu0 0.0
    %755 = vmatprep.subr.mxu0 0.0
    %756 = vmatpush1.msra.mxu0 0.0
    %757 = vmatprep.subr.mxu0 0.0
    %758 = vmatpush1.msra.mxu0 0.0
    %759 = vmatprep.subr.mxu0 0.0
    %760 = vmatpush1.msra.mxu0 0.0
    %761 = vmatprep.subr.mxu0 0.0
    %762 = vmatpush1.msra.mxu0 0.0
    %763 = vmatprep.subr.mxu0 0.0
    %764 = vmatpush1.msra.mxu0 0.0
    %765 = vmatprep.subr.mxu0 0.0
    %766 = vmatpush1.msra.mxu0 0.0
    %767 = vmatprep.subr.mxu0 0.0
    %768 = vmatpush1.msra.mxu0 0.0
    %769 = vmatprep.subr.mxu0 0.0
    %v770 = vand.u32 %v535, 4294901760
    %v771 = vsub.f32 %v535, %v770
    %772 = vmatpush1.msra.mxu0 %v771
    %773 = vmatprep.subr.mxu0 0.0
    %v774 = vand.u32 %v534, 4294901760
    %v775 = vsub.f32 %v534, %v774
    %776 = vmatpush1.msra.mxu0 %v775
    %777 = vmatprep.subr.mxu0 0.0
    %v778 = vand.u32 %v533, 4294901760
    %v779 = vsub.f32 %v533, %v778
    %780 = vmatpush1.msra.mxu0 %v779
    %781 = vmatprep.subr.mxu0 0.0
    %v782 = vand.u32 %v532, 4294901760
    %v783 = vsub.f32 %v532, %v782
    %784 = vmatpush1.msra.mxu0 %v783
    %785 = vmatprep.subr.mxu0 0.0
    %v786 = vand.u32 %v531, 4294901760
    %v787 = vsub.f32 %v531, %v786
    %788 = vmatpush1.msra.mxu0 %v787
    %789 = vmatprep.subr.mxu0 0.0
    %v790 = vand.u32 %v530, 4294901760
    %v791 = vsub.f32 %v530, %v790
    %792 = vmatpush1.msra.mxu0 %v791
    %793 = vmatprep.subr.mxu0 0.0
    %v794 = vand.u32 %v529, 4294901760
    %v795 = vsub.f32 %v529, %v794
    %796 = vmatpush1.msra.mxu0 %v795
    %797 = vmatprep.subr.mxu0 0.0
    %v798 = vand.u32 %v528, 4294901760
    %v799 = vsub.f32 %v528, %v798
    %800 = vmatpush1.msra.mxu0 %v799
    %801 = vmatprep.subr.mxu0 0.0
    %802 = vmatpush2.msra.mxu0 0.0
    %803 = vmatprep.subr.mxu0 0.0
    %804 = vmatpush2.msra.mxu0 0.0
    %805 = vmatprep.subr.mxu0 0.0
    %806 = vmatpush2.msra.mxu0 0.0
    %807 = vmatprep.subr.mxu0 0.0
    %808 = vmatpush2.msra.mxu0 0.0
    %809 = vmatprep.subr.mxu0 0.0
    %810 = vmatpush2.msra.mxu0 0.0
    %811 = vmatprep.subr.mxu0 0.0
    %812 = vmatpush2.msra.mxu0 0.0
    %813 = vmatprep.subr.mxu0 0.0
    %814 = vmatpush2.msra.mxu0 0.0
    %815 = vmatprep.subr.mxu0 0.0
    %816 = vmatpush2.msra.mxu0 0.0
    %817 = vmatprep.subr.mxu0 0.0
    %818 = vmatpush2.msra.mxu0 0.0
    %819 = vmatprep.subr.mxu0 0.0
    %820 = vmatpush2.msra.mxu0 0.0
    %821 = vmatprep.subr.mxu0 0.0
    %822 = vmatpush2.msra.mxu0 0.0
    %823 = vmatprep.subr.mxu0 0.0
    %824 = vmatpush2.msra.mxu0 0.0
    %825 = vmatprep.subr.mxu0 0.0
    %826 = vmatpush2.msra.mxu0 0.0
    %827 = vmatprep.subr.mxu0 0.0
    %828 = vmatpush2.msra.mxu0 0.0
    %829 = vmatprep.subr.mxu0 0.0
    %830 = vmatpush2.msra.mxu0 0.0
    %831 = vmatprep.subr.mxu0 0.0
    %832 = vmatpush2.msra.mxu0 0.0
    %833 = vmatprep.mubr.f32.mxu0 0.0
    %v834 = vand.u32 %v538, 4294901760
    %v835 = vsub.f32 %v538, %v834
    %836 = vmatmul.mubr.f32.gmra.mxu0 %v835
    %v837 = vpop.f32.mrf.mxu0
    %v838 = vadd.f32 %v744, %v837
    %v839 = vpop.f32.mrf.mxu0
    %840 = vmatprep.mubr.f32.mxu0 0.0
    %v841 = vand.u32 %v541, 4294901760
    %v842 = vsub.f32 %v541, %v841
    %843 = vmatmul.mubr.f32.gmra.mxu0 %v842
    %v844 = vpop.f32.mrf.mxu0
    %v845 = vadd.f32 %v750, %v844
    %v846 = vpop.f32.mrf.mxu0
    %847 = vdwg.mxu0
    %848 = vmatprep.subr.mxu0 0.0
    %849 = vmatpush1.msra.mxu0 0.0
    %850 = vmatprep.subr.mxu0 0.0
    %851 = vmatpush1.msra.mxu0 0.0
    %852 = vmatprep.subr.mxu0 0.0
    %853 = vmatpush1.msra.mxu0 0.0
    %854 = vmatprep.subr.mxu0 0.0
    %855 = vmatpush1.msra.mxu0 0.0
    %856 = vmatprep.subr.mxu0 0.0
    %857 = vmatpush1.msra.mxu0 0.0
    %858 = vmatprep.subr.mxu0 0.0
    %859 = vmatpush1.msra.mxu0 0.0
    %860 = vmatprep.subr.mxu0 0.0
    %861 = vmatpush1.msra.mxu0 0.0
    %862 = vmatprep.subr.mxu0 0.0
    %863 = vmatpush1.msra.mxu0 0.0
    %864 = vmatprep.subr.mxu0 0.0
    %v865 = vand.u32 %v535, 4294901760
    %866 = vmatpush1.msra.mxu0 %v865
    %867 = vmatprep.subr.mxu0 0.0
    %v868 = vand.u32 %v534, 4294901760
    %869 = vmatpush1.msra.mxu0 %v868
    %870 = vmatprep.subr.mxu0 0.0
    %v871 = vand.u32 %v533, 4294901760
    %872 = vmatpush1.msra.mxu0 %v871
    %873 = vmatprep.subr.mxu0 0.0
    %v874 = vand.u32 %v532, 4294901760
    %875 = vmatpush1.msra.mxu0 %v874
    %876 = vmatprep.subr.mxu0 0.0
    %v877 = vand.u32 %v531, 4294901760
    %878 = vmatpush1.msra.mxu0 %v877
    %879 = vmatprep.subr.mxu0 0.0
    %v880 = vand.u32 %v530, 4294901760
    %881 = vmatpush1.msra.mxu0 %v880
    %882 = vmatprep.subr.mxu0 0.0
    %v883 = vand.u32 %v529, 4294901760
    %884 = vmatpush1.msra.mxu0 %v883
    %885 = vmatprep.subr.mxu0 0.0
    %v886 = vand.u32 %v528, 4294901760
    %887 = vmatpush1.msra.mxu0 %v886
    %888 = vmatprep.subr.mxu0 0.0
    %889 = vmatpush2.msra.mxu0 0.0
    %890 = vmatprep.subr.mxu0 0.0
    %891 = vmatpush2.msra.mxu0 0.0
    %892 = vmatprep.subr.mxu0 0.0
    %893 = vmatpush2.msra.mxu0 0.0
    %894 = vmatprep.subr.mxu0 0.0
    %895 = vmatpush2.msra.mxu0 0.0
    %896 = vmatprep.subr.mxu0 0.0
    %897 = vmatpush2.msra.mxu0 0.0
    %898 = vmatprep.subr.mxu0 0.0
    %899 = vmatpush2.msra.mxu0 0.0
    %900 = vmatprep.subr.mxu0 0.0
    %901 = vmatpush2.msra.mxu0 0.0
    %902 = vmatprep.subr.mxu0 0.0
    %903 = vmatpush2.msra.mxu0 0.0
    %904 = vmatprep.subr.mxu0 0.0
    %905 = vmatpush2.msra.mxu0 0.0
    %906 = vmatprep.subr.mxu0 0.0
    %907 = vmatpush2.msra.mxu0 0.0
    %908 = vmatprep.subr.mxu0 0.0
    %909 = vmatpush2.msra.mxu0 0.0
    %910 = vmatprep.subr.mxu0 0.0
    %911 = vmatpush2.msra.mxu0 0.0
    %912 = vmatprep.subr.mxu0 0.0
    %913 = vmatpush2.msra.mxu0 0.0
    %914 = vmatprep.subr.mxu0 0.0
    %915 = vmatpush2.msra.mxu0 0.0
    %916 = vmatprep.subr.mxu0 0.0
    %917 = vmatpush2.msra.mxu0 0.0
    %918 = vmatprep.subr.mxu0 0.0
    %919 = vmatpush2.msra.mxu0 0.0
    %920 = vmatprep.mubr.f32.mxu0 0.0
    %v921 = vand.u32 %v538, 4294901760
    %v922 = vsub.f32 %v538, %v921
    %v923 = vand.u32 %v922, 4294901760
    %924 = vmatmul.mubr.f32.gmra.mxu0 %v923
    %v925 = vpop.f32.mrf.mxu0
    %v926 = vadd.f32 %v838, %v925
    %v927 = vpop.f32.mrf.mxu0
    %928 = vmatprep.mubr.f32.mxu0 0.0
    %v929 = vand.u32 %v541, 4294901760
    %v930 = vsub.f32 %v541, %v929
    %v931 = vand.u32 %v930, 4294901760
    %932 = vmatmul.mubr.f32.gmra.mxu0 %v931
    %v933 = vpop.f32.mrf.mxu0
    %v934 = vadd.f32 %v845, %v933
    %v935 = vpop.f32.mrf.mxu0
    %936 = vdwg.mxu0
    %937 = vmatprep.subr.mxu0 0.0
    %938 = vmatpush1.msra.mxu0 0.0
    %939 = vmatprep.subr.mxu0 0.0
    %940 = vmatpush1.msra.mxu0 0.0
    %941 = vmatprep.subr.mxu0 0.0
    %942 = vmatpush1.msra.mxu0 0.0
    %943 = vmatprep.subr.mxu0 0.0
    %944 = vmatpush1.msra.mxu0 0.0
    %945 = vmatprep.subr.mxu0 0.0
    %946 = vmatpush1.msra.mxu0 0.0
    %947 = vmatprep.subr.mxu0 0.0
    %948 = vmatpush1.msra.mxu0 0.0
    %949 = vmatprep.subr.mxu0 0.0
    %950 = vmatpush1.msra.mxu0 0.0
    %951 = vmatprep.subr.mxu0 0.0
    %952 = vmatpush1.msra.mxu0 0.0
    %953 = vmatprep.subr.mxu0 0.0
    %v954 = vand.u32 %v535, 4294901760
    %v955 = vsub.f32 %v535, %v954
    %v956 = vand.u32 %v955, 4294901760
    %957 = vmatpush1.msra.mxu0 %v956
    %958 = vmatprep.subr.mxu0 0.0
    %v959 = vand.u32 %v534, 4294901760
    %v960 = vsub.f32 %v534, %v959
    %v961 = vand.u32 %v960, 4294901760
    %962 = vmatpush1.msra.mxu0 %v961
    %963 = vmatprep.subr.mxu0 0.0
    %v964 = vand.u32 %v533, 4294901760
    %v965 = vsub.f32 %v533, %v964
    %v966 = vand.u32 %v965, 4294901760
    %967 = vmatpush1.msra.mxu0 %v966
    %968 = vmatprep.subr.mxu0 0.0
    %v969 = vand.u32 %v532, 4294901760
    %v970 = vsub.f32 %v532, %v969
    %v971 = vand.u32 %v970, 4294901760
    %972 = vmatpush1.msra.mxu0 %v971
    %973 = vmatprep.subr.mxu0 0.0
    %v974 = vand.u32 %v531, 4294901760
    %v975 = vsub.f32 %v531, %v974
    %v976 = vand.u32 %v975, 4294901760
    %977 = vmatpush1.msra.mxu0 %v976
    %978 = vmatprep.subr.mxu0 0.0
    %v979 = vand.u32 %v530, 4294901760
    %v980 = vsub.f32 %v530, %v979
    %v981 = vand.u32 %v980, 4294901760
    %982 = vmatpush1.msra.mxu0 %v981
    %983 = vmatprep.subr.mxu0 0.0
    %v984 = vand.u32 %v529, 4294901760
    %v985 = vsub.f32 %v529, %v984
    %v986 = vand.u32 %v985, 4294901760
    %987 = vmatpush1.msra.mxu0 %v986
    %988 = vmatprep.subr.mxu0 0.0
    %v989 = vand.u32 %v528, 4294901760
    %v990 = vsub.f32 %v528, %v989
    %v991 = vand.u32 %v990, 4294901760
    %992 = vmatpush1.msra.mxu0 %v991
    %993 = vmatprep.subr.mxu0 0.0
    %994 = vmatpush2.msra.mxu0 0.0
    %995 = vmatprep.subr.mxu0 0.0
    %996 = vmatpush2.msra.mxu0 0.0
    %997 = vmatprep.subr.mxu0 0.0
    %998 = vmatpush2.msra.mxu0 0.0
    %999 = vmatprep.subr.mxu0 0.0
    %1000 = vmatpush2.msra.mxu0 0.0
    %1001 = vmatprep.subr.mxu0 0.0
    %1002 = vmatpush2.msra.mxu0 0.0
    %1003 = vmatprep.subr.mxu0 0.0
    %1004 = vmatpush2.msra.mxu0 0.0
    %1005 = vmatprep.subr.mxu0 0.0
    %1006 = vmatpush2.msra.mxu0 0.0
    %1007 = vmatprep.subr.mxu0 0.0
    %1008 = vmatpush2.msra.mxu0 0.0
    %1009 = vmatprep.subr.mxu0 0.0
    %1010 = vmatpush2.msra.mxu0 0.0
    %1011 = vmatprep.subr.mxu0 0.0
    %1012 = vmatpush2.msra.mxu0 0.0
    %1013 = vmatprep.subr.mxu0 0.0
    %1014 = vmatpush2.msra.mxu0 0.0
    %1015 = vmatprep.subr.mxu0 0.0
    %1016 = vmatpush2.msra.mxu0 0.0
    %1017 = vmatprep.subr.mxu0 0.0
    %1018 = vmatpush2.msra.mxu0 0.0
    %1019 = vmatprep.subr.mxu0 0.0
    %1020 = vmatpush2.msra.mxu0 0.0
    %1021 = vmatprep.subr.mxu0 0.0
    %1022 = vmatpush2.msra.mxu0 0.0
    %1023 = vmatprep.subr.mxu0 0.0
    %1024 = vmatpush2.msra.mxu0 0.0
    %1025 = vmatprep.mubr.f32.mxu0 0.0
    %v1026 = vand.u32 %v538, 4294901760
    %1027 = vmatmul.mubr.f32.gmra.mxu0 %v1026
    %v1028 = vpop.f32.mrf.mxu0
    %v1029 = vadd.f32 %v926, %v1028
    %v1030 = vpop.f32.mrf.mxu0
    %1031 = vmatprep.mubr.f32.mxu0 0.0
    %v1032 = vand.u32 %v541, 4294901760
    %1033 = vmatmul.mubr.f32.gmra.mxu0 %v1032
    %v1034 = vpop.f32.mrf.mxu0
    %v1035 = vadd.f32 %v934, %v1034
    %v1036 = vpop.f32.mrf.mxu0
    %1037 = vdwg.mxu0
    %1038 = vmatprep.subr.mxu0 0.0
    %1039 = vmatpush1.msra.mxu0 0.0
    %1040 = vmatprep.subr.mxu0 0.0
    %1041 = vmatpush1.msra.mxu0 0.0
    %1042 = vmatprep.subr.mxu0 0.0
    %1043 = vmatpush1.msra.mxu0 0.0
    %1044 = vmatprep.subr.mxu0 0.0
    %1045 = vmatpush1.msra.mxu0 0.0
    %1046 = vmatprep.subr.mxu0 0.0
    %1047 = vmatpush1.msra.mxu0 0.0
    %1048 = vmatprep.subr.mxu0 0.0
    %1049 = vmatpush1.msra.mxu0 0.0
    %1050 = vmatprep.subr.mxu0 0.0
    %1051 = vmatpush1.msra.mxu0 0.0
    %1052 = vmatprep.subr.mxu0 0.0
    %1053 = vmatpush1.msra.mxu0 0.0
    %1054 = vmatprep.subr.mxu0 0.0
    %v1055 = vand.u32 %v535, 4294901760
    %1056 = vmatpush1.msra.mxu0 %v1055
    %1057 = vmatprep.subr.mxu0 0.0
    %v1058 = vand.u32 %v534, 4294901760
    %1059 = vmatpush1.msra.mxu0 %v1058
    %1060 = vmatprep.subr.mxu0 0.0
    %v1061 = vand.u32 %v533, 4294901760
    %1062 = vmatpush1.msra.mxu0 %v1061
    %1063 = vmatprep.subr.mxu0 0.0
    %v1064 = vand.u32 %v532, 4294901760
    %1065 = vmatpush1.msra.mxu0 %v1064
    %1066 = vmatprep.subr.mxu0 0.0
    %v1067 = vand.u32 %v531, 4294901760
    %1068 = vmatpush1.msra.mxu0 %v1067
    %1069 = vmatprep.subr.mxu0 0.0
    %v1070 = vand.u32 %v530, 4294901760
    %1071 = vmatpush1.msra.mxu0 %v1070
    %1072 = vmatprep.subr.mxu0 0.0
    %v1073 = vand.u32 %v529, 4294901760
    %1074 = vmatpush1.msra.mxu0 %v1073
    %1075 = vmatprep.subr.mxu0 0.0
    %v1076 = vand.u32 %v528, 4294901760
    %1077 = vmatpush1.msra.mxu0 %v1076
    %1078 = vmatprep.subr.mxu0 0.0
    %1079 = vmatpush2.msra.mxu0 0.0
    %1080 = vmatprep.subr.mxu0 0.0
    %1081 = vmatpush2.msra.mxu0 0.0
    %1082 = vmatprep.subr.mxu0 0.0
    %1083 = vmatpush2.msra.mxu0 0.0
    %1084 = vmatprep.subr.mxu0 0.0
    %1085 = vmatpush2.msra.mxu0 0.0
    %1086 = vmatprep.subr.mxu0 0.0
    %1087 = vmatpush2.msra.mxu0 0.0
    %1088 = vmatprep.subr.mxu0 0.0
    %1089 = vmatpush2.msra.mxu0 0.0
    %1090 = vmatprep.subr.mxu0 0.0
    %1091 = vmatpush2.msra.mxu0 0.0
    %1092 = vmatprep.subr.mxu0 0.0
    %1093 = vmatpush2.msra.mxu0 0.0
    %1094 = vmatprep.subr.mxu0 0.0
    %1095 = vmatpush2.msra.mxu0 0.0
    %1096 = vmatprep.subr.mxu0 0.0
    %1097 = vmatpush2.msra.mxu0 0.0
    %1098 = vmatprep.subr.mxu0 0.0
    %1099 = vmatpush2.msra.mxu0 0.0
    %1100 = vmatprep.subr.mxu0 0.0
    %1101 = vmatpush2.msra.mxu0 0.0
    %1102 = vmatprep.subr.mxu0 0.0
    %1103 = vmatpush2.msra.mxu0 0.0
    %1104 = vmatprep.subr.mxu0 0.0
    %1105 = vmatpush2.msra.mxu0 0.0
    %1106 = vmatprep.subr.mxu0 0.0
    %1107 = vmatpush2.msra.mxu0 0.0
    %1108 = vmatprep.subr.mxu0 0.0
    %1109 = vmatpush2.msra.mxu0 0.0
    %1110 = vmatprep.mubr.f32.mxu0 0.0
    %v1111 = vand.u32 %v538, 4294901760
    %1112 = vmatmul.mubr.f32.gmra.mxu0 %v1111
    %v1113 = vpop.f32.mrf.mxu0
    %v1114 = vadd.f32 %v1029, %v1113
    %v1115 = vpop.f32.mrf.mxu0
    %1116 = vmatprep.mubr.f32.mxu0 0.0
    %v1117 = vand.u32 %v541, 4294901760
    %1118 = vmatmul.mubr.f32.gmra.mxu0 %v1117
    %v1119 = vpop.f32.mrf.mxu0
    %v1120 = vadd.f32 %v1035, %v1119
    %v1121 = vpop.f32.mrf.mxu0
    %1122 = vdwg.mxu0
    %v1123 = vld [vmem:[%s3] sm:$0x7]
    %v1124 = vmul.f32 %v1114, %v1123
    %v1126 = vrot.slane %v1124, 1
    %v1128 = vadd.f32 %v1124, %v1126
    %v1129 = vrot.slane %v1124, 2
    %v1131 = vadd.f32 %v1128, %v1129
    %v1133 = vrot.slane %v1120, 1
    %v1135 = vadd.f32 %v1131, %v1133
    %1136 = vst [vmem:[#allocation10] sm:$0x1] %v1135
    %v1138 = vrot.slane %v1123, 5
    %v1140 = vmul.f32 %v1114, %v1138
    %v1142 = vrot.slane %v1140, 1
    %v1144 = vadd.f32 %v1140, %v1142
    %v1145 = vrot.slane %v1140, 2
    %v1147 = vadd.f32 %v1144, %v1145
    %v1148 = vrot.slane %v1120, 7
    %v1150 = vadd.f32 %v1147, %v1148
    %1151 = vst [vmem:[#allocation10 - $0x2] sm:$0x8] %v1150
    %v1152 = vrot.slane %v1123, 2
    %v1154 = vmul.f32 %v1114, %v1152
    %v1156 = vrot.slane %v1154, 1
    %v1158 = vadd.f32 %v1154, %v1156
    %v1159 = vmul.f32 %v1120, %v1152
    %v1161 = vrot.slane %v1159, 2
    %v1163 = vadd.f32 %v1158, %v1161
    %v1164 = vrot.slane %v1120, 5
    %v1166 = vadd.f32 %v1163, %v1164
    %1167 = vst [vmem:[#allocation10 - $0x4] sm:$0x40] %v1166
    // Predicated region
    $region42: #{tpu_custom_call.1} parent=1 // pred_check
      _
    $region43: #{tpu_custom_call.1} parent=1 // pred_check_branch
      %1169 = sbr.rel (0) target = $region45
    $region44: #{tpu_custom_call.1} parent=1 // pred_region
      %s1171 = ssub.s32 64, 64
      %1172 = vsyncadd [#allocation4], %s1171
      %s1174 = sshll.u32 [#allocation10], 4
      %s1175 = int_to_ptr.vmem [resolvable:$true] %s1174
      %1177 = dma.vmem_to_hbm [thread:$0]  %s1175, 64, %s6, [#allocation4]
    $region45: #{tpu_custom_call.1} parent=1 // pred_fallthru
      _
    // Predicated region
    $region46: #{tpu_custom_call.1} parent=1 // pred_check
      _
    $region47: #{tpu_custom_call.1} parent=1 // pred_check_branch
      %1179 = sbr.rel (0) target = $region49
    $region48: #{tpu_custom_call.1} parent=1 // pred_region
      %1180 = dma.done [#allocation4], 64
    $region49: #{tpu_custom_call.1} parent=1 // pred_fallthru
      _
    %1181 = vsyncpa [#allocation3], 1
    %1182 = vsyncpa [#allocation6], 1
    %1183 = vsyncpa [#allocation9], 1
    %1184 = vsyncpa [#allocation4], 1

</llo_original>
